<compile_context>
chip_gen: v6e
topology: v6e:2x2x1
jax: 0.10.0
libtpu: 0.0.40
codegen_flags: <defaults>
</compile_context>

<pallas_src>
import functools
import math

import numpy as np
import jax
import jax.numpy as jnp
from jax import lax
from jax.experimental import pallas as pl
from jax.experimental.pallas import tpu as pltpu

_NEG_BIG = -1e30  # finite "masked" bias; avoids (-inf) - (-inf) = NaN


# --------------------------------------------------------------------------- #
# helpers
# --------------------------------------------------------------------------- #
def _round_up(x, m):
    return (x + m - 1) // m * m


def _padded_bytes(shape, dtype_bytes, buffers=1):
    """Conservative VMEM footprint of one block: (8, 128) tile padding."""
    padded = list(shape)
    if len(padded) >= 1:
        padded[-1] = _round_up(padded[-1], 128)
    if len(padded) >= 2:
        padded[-2] = _round_up(padded[-2], 8)
    n = 1
    for s in padded:
        n *= s
    return n * dtype_bytes * buffers


def _vmem_limit_bytes(entries):
    """Derive the scoped-VMEM limit from the actual block/scratch footprint."""
    total = sum(_padded_bytes(s, b, n) for (s, b, n) in entries)
    return int(min(max(int(total * 1.25) + (2 << 20), 32 << 20), 100 << 20))


def _pick_seq_tile(n, cap=256):
    """Largest multiple-of-8 divisor of n that is <= cap (or n itself)."""
    if n <= cap:
        return n
    for t in range(cap, 7, -8):
        if n % t == 0:
            return t
    return n  # no nice divisor: fall back to a single (untile-able) block


def _weight_spec(block_shape, index_map, single_buffer):
    """Constant-index weight block; single-buffered when supported."""
    if single_buffer:
        try:
            return pl.BlockSpec(block_shape, index_map,
                                pipeline_mode=pl.Buffered(1))
        except Exception:
            pass
    return pl.BlockSpec(block_shape, index_map)


# --------------------------------------------------------------------------- #
# pass 1: QKV projection (computed exactly once, head-major bf16 outputs)
# --------------------------------------------------------------------------- #
def _qkv_proj_kernel(x_ref, wq_ref, wk_ref, wv_ref, q_out, k_out, v_out,
                     tmp_scr, *, num_heads):
    """One row tile of x -> head-major Q (pre-scaled), K, V.

    x_ref   : (tr, D) bf16
    w*_ref  : (D, D)  bf16 (Wq^T has the softmax scale folded in)
    *_out   : (H, tr, d) bf16
    tmp_scr : (tr, D) bf16 scratch (full-width matmul result before head split)
    """
    d = q_out.shape[-1]
    x = x_ref[...]
    for w_ref, out in ((wq_ref, q_out), (wk_ref, k_out), (wv_ref, v_out)):
        # Full-width (tr, D) @ (D, D) matmul — D-deep, D-wide MXU work.
        tmp_scr[...] = jnp.dot(
            x, w_ref[...], preferred_element_type=jnp.float32
        ).astype(tmp_scr.dtype)
        # Split into heads once, here (so the attention kernel never slices lanes
        # in its inner loop).
        for h in range(num_heads):
            out[h] = tmp_scr[:, h * d:(h + 1) * d]


def _qkv_projection(x_bf, wq_t, wk_t, wv_t, *, num_heads, tr, single_buffer):
    B, N, D = x_bf.shape
    d = D // num_heads
    nr = N // tr

    kernel = functools.partial(_qkv_proj_kernel, num_heads=num_heads)
    out_sds = jax.ShapeDtypeStruct((B, num_heads, N, d), jnp.bfloat16)

    wbuf = 1 if single_buffer else 2
    vmem_limit = _vmem_limit_bytes(
        [((tr, D), 2, 2)]
        + [((D, D), 2, wbuf)] * 3
        + [((num_heads, tr, d), 2, 2)] * 3
        + [((tr, D), 2, 1)]
    )

    def out_spec():
        return pl.BlockSpec((None, num_heads, tr, d), lambda b, r: (b, 0, r, 0))

    return pl.pallas_call(
        kernel,
        out_shape=(out_sds, out_sds, out_sds),
        grid_spec=pltpu.PrefetchScalarGridSpec(
            num_scalar_prefetch=0,
            grid=(B, nr),
            in_specs=[
                pl.BlockSpec((None, tr, D), lambda b, r: (b, r, 0)),
                _weight_spec((D, D), lambda b, r: (0, 0), single_buffer),
                _weight_spec((D, D), lambda b, r: (0, 0), single_buffer),
                _weight_spec((D, D), lambda b, r: (0, 0), single_buffer),
            ],
            out_specs=(out_spec(), out_spec(), out_spec()),
            scratch_shapes=[pltpu.VMEM((tr, D), jnp.bfloat16)],
        ),
        compiler_params=pltpu.CompilerParams(
            dimension_semantics=("parallel", "parallel"),
            vmem_limit_bytes=vmem_limit,
        ),
    )(x_bf, wq_t, wk_t, wv_t)


# --------------------------------------------------------------------------- #
# pass 2: flash attention (heads batched) + fused output projection
# --------------------------------------------------------------------------- #
def _flash_attn_kernel(*refs, num_heads, tq, tk, is_causal, has_mask):
    """Grid (B, nq, nk); kv axis last ("arbitrary" / reduction).

    q_ref    : (H, tq, d) bf16  (pre-scaled)
    k_ref    : (H, tk, d) bf16
    v_ref    : (H, tk, d) bf16
    wo_ref   : (D, D)     bf16  Wo^T
    bo_ref   : (1, D)     f32
    maskb_ref: (1, tk)    f32   additive key bias (only when attn_mask given)
    o_ref    : (tq, D)

    scratch (persist across the kv axis):
    m_scr   : (H, tq, 1) f32   running row max
    l_scr   : (H, tq, 1) f32   running row sum
    acc_scr : (H, tq, d) f32   unnormalized attn @ V (head-major, dense updates)
    cat_scr : (tq, D)    bf16  packed heads for the single output projection
    """
    if has_mask:
        (q_ref, k_ref, v_ref, wo_ref, bo_ref, maskb_ref, o_ref,
         m_scr, l_scr, acc_scr, cat_scr) = refs
    else:
        (q_ref, k_ref, v_ref, wo_ref, bo_ref, o_ref,
         m_scr, l_scr, acc_scr, cat_scr) = refs
        maskb_ref = None

    qi = pl.program_id(1)
    ki = pl.program_id(2)
    nk = pl.num_programs(2)
    d = acc_scr.shape[-1]

    @pl.when(ki == 0)
    def _init():
        m_scr[...] = jnp.full_like(m_scr, -jnp.inf)
        l_scr[...] = jnp.zeros_like(l_scr)
        acc_scr[...] = jnp.zeros_like(acc_scr)

    def _process():
        q = q_ref[...]                                        # (H, tq, d) bf16
        k = k_ref[...]                                        # (H, tk, d) bf16
        v = v_ref[...]                                        # (H, tk, d) bf16

        # All heads in one batched matmul (no per-head micro-matmuls).
        s = jnp.einsum("hqd,hkd->hqk", q, k,
                       preferred_element_type=jnp.float32)    # (H, tq, tk)

        # Combined bias tile built once per kv step, shared by every head.
        bias = None
        if has_mask:
            bias = maskb_ref[...]                             # (1, tk)
        if is_causal:
            q_idx = qi * tq + lax.broadcasted_iota(jnp.int32, (tq, tk), 0)
            k_idx = ki * tk + lax.broadcasted_iota(jnp.int32, (tq, tk), 1)
            causal = jnp.where(k_idx <= q_idx, 0.0, _NEG_BIG)  # (tq, tk)
            bias = causal if bias is None else bias + causal
        if bias is not None:
            s = s + bias                                      # broadcast over H

        m_prev = m_scr[...]                                   # (H, tq, 1)
        m_new = jnp.maximum(m_prev, jnp.max(s, axis=-1, keepdims=True))
        alpha = jnp.exp(m_prev - m_new)
        p = jnp.exp(s - m_new)                                # (H, tq, tk) f32
        l_scr[...] = alpha * l_scr[...] + jnp.sum(p, axis=-1, keepdims=True)
        pv = jnp.einsum("hqk,hkd->hqd", p.astype(jnp.bfloat16), v,
                        preferred_element_type=jnp.float32)   # (H, tq, d)
        acc_scr[...] = alpha * acc_scr[...] + pv               # dense update
        m_scr[...] = m_new

    if is_causal:
        # kv tiles entirely above the diagonal: compute skipped (the index_map
        # clamp already avoided fetching a new block for them).
        @pl.when(ki * tk <= qi * tq + (tq - 1))
        def _():
            _process()
    else:
        _process()

    @pl.when(ki == nk - 1)
    def _finalize():
        inv_l = pl.reciprocal(l_scr[...], approx=True)        # EUP
        outs = (acc_scr[...] * inv_l).astype(jnp.bfloat16)    # (H, tq, d)
        # Pack heads back to (tq, D) once per q tile (not per kv step).
        for h in range(num_heads):
            cat_scr[:, h * d:(h + 1) * d] = outs[h]
        # Single D-deep output projection + bias.
        y = jnp.dot(cat_scr[...], wo_ref[...],
                    preferred_element_type=jnp.float32)
        o_ref[...] = (y + bo_ref[...]).astype(o_ref.dtype)


def _flash_attention(q_hm, k_hm, v_hm, wo_t, bo, mask_bias, *, out_dtype,
                     tq, tk, is_causal, single_buffer):
    B, H, N, d = q_hm.shape
    D = H * d
    nq, nk = N // tq, N // tk
    has_mask = mask_bias is not None

    kernel = functools.partial(
        _flash_attn_kernel, num_heads=H, tq=tq, tk=tk,
        is_causal=is_causal, has_mask=has_mask)

    if is_causal:
        # Clamp dead (above-diagonal) steps to the last useful kv tile so the
        # pipeline re-references the resident block instead of issuing new DMA.
        def kv_block(qi, ki):
            return jnp.minimum(ki, (qi * tq + (tq - 1)) // tk)
    else:
        def kv_block(qi, ki):
            return ki

    in_specs = [
        pl.BlockSpec((None, H, tq, d), lambda b, qi, ki: (b, 0, qi, 0)),
        pl.BlockSpec((None, H, tk, d),
                     lambda b, qi, ki: (b, 0, kv_block(qi, ki), 0)),
        pl.BlockSpec((None, H, tk, d),
                     lambda b, qi, ki: (b, 0, kv_block(qi, ki), 0)),
        _weight_spec((D, D), lambda b, qi, ki: (0, 0), single_buffer),
        _weight_spec((1, D), lambda b, qi, ki: (0, 0), single_buffer),
    ]
    args = [q_hm, k_hm, v_hm, wo_t, bo]
    if has_mask:
        in_specs.append(
            pl.BlockSpec((None, 1, tk),
                         lambda b, qi, ki: (b, 0, kv_block(qi, ki))))
        args.append(mask_bias)

    wbuf = 1 if single_buffer else 2
    entries = ([((H, tq, d), 2, 2), ((H, tk, d), 2, 2), ((H, tk, d), 2, 2),
                ((D, D), 2, wbuf), ((1, D), 4, wbuf), ((tq, D), 4, 2),
                ((H, tq, 1), 4, 1), ((H, tq, 1), 4, 1),
                ((H, tq, d), 4, 1), ((tq, D), 2, 1)]
               + ([((1, tk), 4, 2)] if has_mask else []))
    vmem_limit = _vmem_limit_bytes(entries)

    return pl.pallas_call(
        kernel,
        out_shape=jax.ShapeDtypeStruct((B, N, D), out_dtype),
        grid_spec=pltpu.PrefetchScalarGridSpec(
            num_scalar_prefetch=0,
            grid=(B, nq, nk),
            in_specs=in_specs,
            out_specs=pl.BlockSpec((None, tq, D), lambda b, qi, ki: (b, qi, 0)),
            scratch_shapes=[
                pltpu.VMEM((H, tq, 1), jnp.float32),   # running row max
                pltpu.VMEM((H, tq, 1), jnp.float32),   # running row sum
                pltpu.VMEM((H, tq, d), jnp.float32),   # unnormalized acc
                pltpu.VMEM((tq, D), jnp.bfloat16),     # packed heads
            ],
        ),
        compiler_params=pltpu.CompilerParams(
            dimension_semantics=("parallel", "parallel", "arbitrary"),
            vmem_limit_bytes=vmem_limit,
        ),
    )(*args)


# --------------------------------------------------------------------------- #
# public wrapper
# --------------------------------------------------------------------------- #
def self_attention_forward(x, params, *, num_heads, is_causal=False,
                           attn_mask=None):
    """Pallas-backed forward pass of SelfAttention.

    x: (B, N, D) float32.  attn_mask: optional (B, N), >0 means attend.
    params: dict with 'wq','wk','wv','wo' of shape (D, D) in PyTorch (out,in)
    convention and 'bo' of shape (D,).
    """
    B, N, D = x.shape
    assert D % num_heads == 0
    d = D // num_heads
    scale = d ** (-0.5)

    # Sequence tiles: up to 256 rows (bigger tiles amortize grid-step overhead);
    # cap the q tile at 128 when B == 1 so B*nq >= 2 keeps both v7x cores busy.
    tr = _pick_seq_tile(N, cap=256)
    tq = _pick_seq_tile(N, cap=256 if B > 1 else 128)
    tk = _pick_seq_tile(N, cap=256)

    # bf16 MXU operands; softmax scale folded into Wq on the host.
    x_bf = x.astype(jnp.bfloat16)
    wq_t = (params["wq"].T * scale).astype(jnp.bfloat16)
    wk_t = params["wk"].T.astype(jnp.bfloat16)
    wv_t = params["wv"].T.astype(jnp.bfloat16)
    wo_t = params["wo"].T.astype(jnp.bfloat16)
    bo = params["bo"].reshape(1, D).astype(jnp.float32)

    # Additive key bias only when a mask is given (no zero-bias input otherwise).
    if attn_mask is None:
        mask_bias = None
    else:
        mask_bias = jnp.where(attn_mask > 0, 0.0, _NEG_BIG)
        mask_bias = mask_bias.reshape(B, 1, N).astype(jnp.float32)

    def _run(single_buffer):
        q_hm, k_hm, v_hm = _qkv_projection(
            x_bf, wq_t, wk_t, wv_t,
            num_heads=num_heads, tr=tr, single_buffer=single_buffer)
        return _flash_attention(
            q_hm, k_hm, v_hm, wo_t, bo, mask_bias,
            out_dtype=x.dtype, tq=tq, tk=tk,
            is_causal=is_causal, single_buffer=single_buffer)

    try:
        return _run(True)       # single-buffered constant weight blocks
    except Exception:
        # pl.Buffered(1) pipeline_mode unsupported on this jax version/backend:
        # fall back to default (double-buffered) weight blocks.
        return _run(False)


# --------------------------------------------------------------------------- #
# pure-JAX reference + init + self-test
# --------------------------------------------------------------------------- #
def ref_forward(x, params, *, num_heads, is_causal=False, attn_mask=None):
    """Pure-JAX reference mirroring the PyTorch module (f32 throughout)."""
    B, N, D = x.shape
    d = D // num_heads
    scale = d ** (-0.5)
    q = x @ params["wq"].T
    k = x @ params["wk"].T
    v = x @ params["wv"].T

    def split(t):
        return t.reshape(B, N, num_heads, d).transpose(0, 2, 1, 3)

    q, k, v = split(q), split(k), split(v)
    bias = jnp.zeros((N, N), x.dtype)
    if is_causal:
        tri = jnp.tril(jnp.ones((N, N), bool))
        bias = jnp.where(tri, bias, -jnp.inf)
    bias = jnp.broadcast_to(bias, (B, 1, N, N))
    if attn_mask is not None:
        bias = jnp.where((attn_mask > 0)[:, None, None, :], bias, -jnp.inf)
    s = jnp.einsum("bhnd,bhmd->bhnm", q, k) * scale + bias
    p = jax.nn.softmax(s, axis=-1)
    o = jnp.einsum("bhnm,bhmd->bhnd", p, v)
    o = o.transpose(0, 2, 1, 3).reshape(B, N, D)
    return o @ params["wo"].T + params["bo"]


def init_params(key, model_dim):
    """Deterministic init, PyTorch-Linear-like uniform(-1/sqrt(fan_in), ...)."""
    ks = jax.random.split(key, 5)
    bound = 1.0 / math.sqrt(model_dim)
    u = lambda k, shape: jax.random.uniform(k, shape, jnp.float32, -bound, bound)
    return {
        "wq": u(ks[0], (model_dim, model_dim)),
        "wk": u(ks[1], (model_dim, model_dim)),
        "wv": u(ks[2], (model_dim, model_dim)),
        "wo": u(ks[3], (model_dim, model_dim)),
        "bo": u(ks[4], (model_dim,)),
    }


if __name__ == "__main__":
    B, N, D, H = 2, 8, 32, 4

    key = jax.random.PRNGKey(0)
    kx, kp = jax.random.split(key, 2)
    x = jax.random.normal(kx, (B, N, D), jnp.float32)
    params = init_params(kp, D)

    # Case 1: plain attention (no mask, not causal) -> no bias input at all.
    out1 = self_attention_forward(x, params, num_heads=H)
    jax.block_until_ready(out1)
    ref1 = ref_forward(x, params, num_heads=H)
    np.testing.assert_allclose(np.asarray(out1), np.asarray(ref1),
                               rtol=2e-2, atol=2e-2)

    # Case 2: causal + key-padding mask (last two keys of batch 1 masked out).
    attn_mask = jnp.ones((B, N), jnp.float32).at[1, -2:].set(0.0)
    out2 = self_attention_forward(x, params, num_heads=H, is_causal=True,
                                  attn_mask=attn_mask)
    jax.block_until_ready(out2)
    ref2 = ref_forward(x, params, num_heads=H, is_causal=True,
                       attn_mask=attn_mask)
    np.testing.assert_allclose(np.asarray(out2), np.asarray(ref2),
                               rtol=2e-2, atol=2e-2)

    print("KERNEL_OK")
</pallas_src>

<mosaic_0001>
module attributes {stable_mosaic.version = 11 : i64} {
  func.func @_qkv_proj_kernel(%arg0: i32, %arg1: i32, %arg2: memref<1x8x32xbf16, #tpu.memory_space<vmem>>, %arg3: memref<32x32xbf16, #tpu.memory_space<vmem>>, %arg4: memref<32x32xbf16, #tpu.memory_space<vmem>>, %arg5: memref<32x32xbf16, #tpu.memory_space<vmem>>, %arg6: memref<1x4x8x8xbf16, #tpu.memory_space<vmem>>, %arg7: memref<1x4x8x8xbf16, #tpu.memory_space<vmem>>, %arg8: memref<1x4x8x8xbf16, #tpu.memory_space<vmem>>, %arg9: memref<8x32xbf16, #tpu.memory_space<vmem>>) attributes {dimension_semantics = [#tpu.dimension_semantics<parallel>, #tpu.dimension_semantics<parallel>], iteration_bounds = array<i64: 2, 1>, scalar_prefetch = 0 : i64, scratch_operands = 1 : i64, tpu.core_type = #tpu.core_type<tc>, window_params = [{transform_indices = @transform_0, window_bounds = array<i64: 1, 8, 32>}, {pipeline_mode = #tpu.pipeline_mode<synchronous>, transform_indices = @transform_1, window_bounds = array<i64: 32, 32>}, {pipeline_mode = #tpu.pipeline_mode<synchronous>, transform_indices = @transform_2, window_bounds = array<i64: 32, 32>}, {pipeline_mode = #tpu.pipeline_mode<synchronous>, transform_indices = @transform_3, window_bounds = array<i64: 32, 32>}, {transform_indices = @transform_4, window_bounds = array<i64: 1, 4, 8, 8>}, {transform_indices = @transform_5, window_bounds = array<i64: 1, 4, 8, 8>}, {transform_indices = @transform_6, window_bounds = array<i64: 1, 4, 8, 8>}]} {
    %c0 = arith.constant 0 : index
    %c0_0 = arith.constant 0 : index
    %c0_1 = arith.constant 0 : index
    %0 = vector.load %arg2[%c0, %c0_0, %c0_1] : memref<1x8x32xbf16, #tpu.memory_space<vmem>>, vector<1x8x32xbf16>
    %1 = vector.shape_cast %0 : vector<1x8x32xbf16> to vector<8x32xbf16>
    %c0_2 = arith.constant 0 : index
    %c0_3 = arith.constant 0 : index
    %2 = vector.load %arg3[%c0_2, %c0_3] : memref<32x32xbf16, #tpu.memory_space<vmem>>, vector<32x32xbf16>
    %cst = arith.constant dense<0.000000e+00> : vector<8x32xf32>
    %3 = tpu.matmul %1, %2, %cst {dimension_numbers = #tpu.dot_dimension_numbers<[1], [0], [0], [1], [0, 0, 1, 1], [], []>} : vector<8x32xbf16>, vector<32x32xbf16>, vector<8x32xf32> -> vector<8x32xf32>
    %4 = arith.truncf %3 : vector<8x32xf32> to vector<8x32xbf16>
    %c0_4 = arith.constant 0 : index
    %c0_5 = arith.constant 0 : index
    %5 = vector.load %arg9[%c0_4, %c0_5] : memref<8x32xbf16, #tpu.memory_space<vmem>>, vector<8x32xbf16>
    tpu.vector_store %arg9[%c0_4, %c0_5], %4 {strides = array<i32>} : memref<8x32xbf16, #tpu.memory_space<vmem>>, vector<8x32xbf16>,
    %c0_6 = arith.constant 0 : index
    %c0_7 = arith.constant 0 : index
    %6 = vector.load %arg9[%c0_6, %c0_7] : memref<8x32xbf16, #tpu.memory_space<vmem>>, vector<8x8xbf16>
    %c0_8 = arith.constant 0 : index
    %c0_9 = arith.constant 0 : index
    %c0_10 = arith.constant 0 : index
    %c0_11 = arith.constant 0 : index
    %7 = vector.load %arg6[%c0_8, %c0_9, %c0_10, %c0_11] : memref<1x4x8x8xbf16, #tpu.memory_space<vmem>>, vector<1x1x8x8xbf16>
    %8 = vector.shape_cast %7 : vector<1x1x8x8xbf16> to vector<8x8xbf16>
    %9 = vector.shape_cast %6 : vector<8x8xbf16> to vector<1x1x8x8xbf16>
    tpu.vector_store %arg6[%c0_8, %c0_9, %c0_10, %c0_11], %9 {strides = array<i32>} : memref<1x4x8x8xbf16, #tpu.memory_space<vmem>>, vector<1x1x8x8xbf16>,
    %c0_12 = arith.constant 0 : index
    %c8 = arith.constant 8 : index
    %10 = vector.load %arg9[%c0_12, %c8] : memref<8x32xbf16, #tpu.memory_space<vmem>>, vector<8x8xbf16>
    %c0_13 = arith.constant 0 : index
    %c1 = arith.constant 1 : index
    %c0_14 = arith.constant 0 : index
    %c0_15 = arith.constant 0 : index
    %11 = vector.load %arg6[%c0_13, %c1, %c0_14, %c0_15] : memref<1x4x8x8xbf16, #tpu.memory_space<vmem>>, vector<1x1x8x8xbf16>
    %12 = vector.shape_cast %11 : vector<1x1x8x8xbf16> to vector<8x8xbf16>
    %13 = vector.shape_cast %10 : vector<8x8xbf16> to vector<1x1x8x8xbf16>
    tpu.vector_store %arg6[%c0_13, %c1, %c0_14, %c0_15], %13 {strides = array<i32>} : memref<1x4x8x8xbf16, #tpu.memory_space<vmem>>, vector<1x1x8x8xbf16>,
    %c0_16 = arith.constant 0 : index
    %c16 = arith.constant 16 : index
    %14 = vector.load %arg9[%c0_16, %c16] : memref<8x32xbf16, #tpu.memory_space<vmem>>, vector<8x8xbf16>
    %c0_17 = arith.constant 0 : index
    %c2 = arith.constant 2 : index
    %c0_18 = arith.constant 0 : index
    %c0_19 = arith.constant 0 : index
    %15 = vector.load %arg6[%c0_17, %c2, %c0_18, %c0_19] : memref<1x4x8x8xbf16, #tpu.memory_space<vmem>>, vector<1x1x8x8xbf16>
    %16 = vector.shape_cast %15 : vector<1x1x8x8xbf16> to vector<8x8xbf16>
    %17 = vector.shape_cast %14 : vector<8x8xbf16> to vector<1x1x8x8xbf16>
    tpu.vector_store %arg6[%c0_17, %c2, %c0_18, %c0_19], %17 {strides = array<i32>} : memref<1x4x8x8xbf16, #tpu.memory_space<vmem>>, vector<1x1x8x8xbf16>,
    %c0_20 = arith.constant 0 : index
    %c24 = arith.constant 24 : index
    %18 = vector.load %arg9[%c0_20, %c24] : memref<8x32xbf16, #tpu.memory_space<vmem>>, vector<8x8xbf16>
    %c0_21 = arith.constant 0 : index
    %c3 = arith.constant 3 : index
    %c0_22 = arith.constant 0 : index
    %c0_23 = arith.constant 0 : index
    %19 = vector.load %arg6[%c0_21, %c3, %c0_22, %c0_23] : memref<1x4x8x8xbf16, #tpu.memory_space<vmem>>, vector<1x1x8x8xbf16>
    %20 = vector.shape_cast %19 : vector<1x1x8x8xbf16> to vector<8x8xbf16>
    %21 = vector.shape_cast %18 : vector<8x8xbf16> to vector<1x1x8x8xbf16>
    tpu.vector_store %arg6[%c0_21, %c3, %c0_22, %c0_23], %21 {strides = array<i32>} : memref<1x4x8x8xbf16, #tpu.memory_space<vmem>>, vector<1x1x8x8xbf16>,
    %c0_24 = arith.constant 0 : index
    %c0_25 = arith.constant 0 : index
    %22 = vector.load %arg4[%c0_24, %c0_25] : memref<32x32xbf16, #tpu.memory_space<vmem>>, vector<32x32xbf16>
    %cst_26 = arith.constant dense<0.000000e+00> : vector<8x32xf32>
    %23 = tpu.matmul %1, %22, %cst_26 {dimension_numbers = #tpu.dot_dimension_numbers<[1], [0], [0], [1], [0, 0, 1, 1], [], []>} : vector<8x32xbf16>, vector<32x32xbf16>, vector<8x32xf32> -> vector<8x32xf32>
    %24 = arith.truncf %23 : vector<8x32xf32> to vector<8x32xbf16>
    %c0_27 = arith.constant 0 : index
    %c0_28 = arith.constant 0 : index
    %25 = vector.load %arg9[%c0_27, %c0_28] : memref<8x32xbf16, #tpu.memory_space<vmem>>, vector<8x32xbf16>
    tpu.vector_store %arg9[%c0_27, %c0_28], %24 {strides = array<i32>} : memref<8x32xbf16, #tpu.memory_space<vmem>>, vector<8x32xbf16>,
    %c0_29 = arith.constant 0 : index
    %c0_30 = arith.constant 0 : index
    %26 = vector.load %arg9[%c0_29, %c0_30] : memref<8x32xbf16, #tpu.memory_space<vmem>>, vector<8x8xbf16>
    %c0_31 = arith.constant 0 : index
    %c0_32 = arith.constant 0 : index
    %c0_33 = arith.constant 0 : index
    %c0_34 = arith.constant 0 : index
    %27 = vector.load %arg7[%c0_31, %c0_32, %c0_33, %c0_34] : memref<1x4x8x8xbf16, #tpu.memory_space<vmem>>, vector<1x1x8x8xbf16>
    %28 = vector.shape_cast %27 : vector<1x1x8x8xbf16> to vector<8x8xbf16>
    %29 = vector.shape_cast %26 : vector<8x8xbf16> to vector<1x1x8x8xbf16>
    tpu.vector_store %arg7[%c0_31, %c0_32, %c0_33, %c0_34], %29 {strides = array<i32>} : memref<1x4x8x8xbf16, #tpu.memory_space<vmem>>, vector<1x1x8x8xbf16>,
    %c0_35 = arith.constant 0 : index
    %c8_36 = arith.constant 8 : index
    %30 = vector.load %arg9[%c0_35, %c8_36] : memref<8x32xbf16, #tpu.memory_space<vmem>>, vector<8x8xbf16>
    %c0_37 = arith.constant 0 : index
    %c1_38 = arith.constant 1 : index
    %c0_39 = arith.constant 0 : index
    %c0_40 = arith.constant 0 : index
    %31 = vector.load %arg7[%c0_37, %c1_38, %c0_39, %c0_40] : memref<1x4x8x8xbf16, #tpu.memory_space<vmem>>, vector<1x1x8x8xbf16>
    %32 = vector.shape_cast %31 : vector<1x1x8x8xbf16> to vector<8x8xbf16>
    %33 = vector.shape_cast %30 : vector<8x8xbf16> to vector<1x1x8x8xbf16>
    tpu.vector_store %arg7[%c0_37, %c1_38, %c0_39, %c0_40], %33 {strides = array<i32>} : memref<1x4x8x8xbf16, #tpu.memory_space<vmem>>, vector<1x1x8x8xbf16>,
    %c0_41 = arith.constant 0 : index
    %c16_42 = arith.constant 16 : index
    %34 = vector.load %arg9[%c0_41, %c16_42] : memref<8x32xbf16, #tpu.memory_space<vmem>>, vector<8x8xbf16>
    %c0_43 = arith.constant 0 : index
    %c2_44 = arith.constant 2 : index
    %c0_45 = arith.constant 0 : index
    %c0_46 = arith.constant 0 : index
    %35 = vector.load %arg7[%c0_43, %c2_44, %c0_45, %c0_46] : memref<1x4x8x8xbf16, #tpu.memory_space<vmem>>, vector<1x1x8x8xbf16>
    %36 = vector.shape_cast %35 : vector<1x1x8x8xbf16> to vector<8x8xbf16>
    %37 = vector.shape_cast %34 : vector<8x8xbf16> to vector<1x1x8x8xbf16>
    tpu.vector_store %arg7[%c0_43, %c2_44, %c0_45, %c0_46], %37 {strides = array<i32>} : memref<1x4x8x8xbf16, #tpu.memory_space<vmem>>, vector<1x1x8x8xbf16>,
    %c0_47 = arith.constant 0 : index
    %c24_48 = arith.constant 24 : index
    %38 = vector.load %arg9[%c0_47, %c24_48] : memref<8x32xbf16, #tpu.memory_space<vmem>>, vector<8x8xbf16>
    %c0_49 = arith.constant 0 : index
    %c3_50 = arith.constant 3 : index
    %c0_51 = arith.constant 0 : index
    %c0_52 = arith.constant 0 : index
    %39 = vector.load %arg7[%c0_49, %c3_50, %c0_51, %c0_52] : memref<1x4x8x8xbf16, #tpu.memory_space<vmem>>, vector<1x1x8x8xbf16>
    %40 = vector.shape_cast %39 : vector<1x1x8x8xbf16> to vector<8x8xbf16>
    %41 = vector.shape_cast %38 : vector<8x8xbf16> to vector<1x1x8x8xbf16>
    tpu.vector_store %arg7[%c0_49, %c3_50, %c0_51, %c0_52], %41 {strides = array<i32>} : memref<1x4x8x8xbf16, #tpu.memory_space<vmem>>, vector<1x1x8x8xbf16>,
    %c0_53 = arith.constant 0 : index
    %c0_54 = arith.constant 0 : index
    %42 = vector.load %arg5[%c0_53, %c0_54] : memref<32x32xbf16, #tpu.memory_space<vmem>>, vector<32x32xbf16>
    %cst_55 = arith.constant dense<0.000000e+00> : vector<8x32xf32>
    %43 = tpu.matmul %1, %42, %cst_55 {dimension_numbers = #tpu.dot_dimension_numbers<[1], [0], [0], [1], [0, 0, 1, 1], [], []>} : vector<8x32xbf16>, vector<32x32xbf16>, vector<8x32xf32> -> vector<8x32xf32>
    %44 = arith.truncf %43 : vector<8x32xf32> to vector<8x32xbf16>
    %c0_56 = arith.constant 0 : index
    %c0_57 = arith.constant 0 : index
    %45 = vector.load %arg9[%c0_56, %c0_57] : memref<8x32xbf16, #tpu.memory_space<vmem>>, vector<8x32xbf16>
    tpu.vector_store %arg9[%c0_56, %c0_57], %44 {strides = array<i32>} : memref<8x32xbf16, #tpu.memory_space<vmem>>, vector<8x32xbf16>,
    %c0_58 = arith.constant 0 : index
    %c0_59 = arith.constant 0 : index
    %46 = vector.load %arg9[%c0_58, %c0_59] : memref<8x32xbf16, #tpu.memory_space<vmem>>, vector<8x8xbf16>
    %c0_60 = arith.constant 0 : index
    %c0_61 = arith.constant 0 : index
    %c0_62 = arith.constant 0 : index
    %c0_63 = arith.constant 0 : index
    %47 = vector.load %arg8[%c0_60, %c0_61, %c0_62, %c0_63] : memref<1x4x8x8xbf16, #tpu.memory_space<vmem>>, vector<1x1x8x8xbf16>
    %48 = vector.shape_cast %47 : vector<1x1x8x8xbf16> to vector<8x8xbf16>
    %49 = vector.shape_cast %46 : vector<8x8xbf16> to vector<1x1x8x8xbf16>
    tpu.vector_store %arg8[%c0_60, %c0_61, %c0_62, %c0_63], %49 {strides = array<i32>} : memref<1x4x8x8xbf16, #tpu.memory_space<vmem>>, vector<1x1x8x8xbf16>,
    %c0_64 = arith.constant 0 : index
    %c8_65 = arith.constant 8 : index
    %50 = vector.load %arg9[%c0_64, %c8_65] : memref<8x32xbf16, #tpu.memory_space<vmem>>, vector<8x8xbf16>
    %c0_66 = arith.constant 0 : index
    %c1_67 = arith.constant 1 : index
    %c0_68 = arith.constant 0 : index
    %c0_69 = arith.constant 0 : index
    %51 = vector.load %arg8[%c0_66, %c1_67, %c0_68, %c0_69] : memref<1x4x8x8xbf16, #tpu.memory_space<vmem>>, vector<1x1x8x8xbf16>
    %52 = vector.shape_cast %51 : vector<1x1x8x8xbf16> to vector<8x8xbf16>
    %53 = vector.shape_cast %50 : vector<8x8xbf16> to vector<1x1x8x8xbf16>
    tpu.vector_store %arg8[%c0_66, %c1_67, %c0_68, %c0_69], %53 {strides = array<i32>} : memref<1x4x8x8xbf16, #tpu.memory_space<vmem>>, vector<1x1x8x8xbf16>,
    %c0_70 = arith.constant 0 : index
    %c16_71 = arith.constant 16 : index
    %54 = vector.load %arg9[%c0_70, %c16_71] : memref<8x32xbf16, #tpu.memory_space<vmem>>, vector<8x8xbf16>
    %c0_72 = arith.constant 0 : index
    %c2_73 = arith.constant 2 : index
    %c0_74 = arith.constant 0 : index
    %c0_75 = arith.constant 0 : index
    %55 = vector.load %arg8[%c0_72, %c2_73, %c0_74, %c0_75] : memref<1x4x8x8xbf16, #tpu.memory_space<vmem>>, vector<1x1x8x8xbf16>
    %56 = vector.shape_cast %55 : vector<1x1x8x8xbf16> to vector<8x8xbf16>
    %57 = vector.shape_cast %54 : vector<8x8xbf16> to vector<1x1x8x8xbf16>
    tpu.vector_store %arg8[%c0_72, %c2_73, %c0_74, %c0_75], %57 {strides = array<i32>} : memref<1x4x8x8xbf16, #tpu.memory_space<vmem>>, vector<1x1x8x8xbf16>,
    %c0_76 = arith.constant 0 : index
    %c24_77 = arith.constant 24 : index
    %58 = vector.load %arg9[%c0_76, %c24_77] : memref<8x32xbf16, #tpu.memory_space<vmem>>, vector<8x8xbf16>
    %c0_78 = arith.constant 0 : index
    %c3_79 = arith.constant 3 : index
    %c0_80 = arith.constant 0 : index
    %c0_81 = arith.constant 0 : index
    %59 = vector.load %arg8[%c0_78, %c3_79, %c0_80, %c0_81] : memref<1x4x8x8xbf16, #tpu.memory_space<vmem>>, vector<1x1x8x8xbf16>
    %60 = vector.shape_cast %59 : vector<1x1x8x8xbf16> to vector<8x8xbf16>
    %61 = vector.shape_cast %58 : vector<8x8xbf16> to vector<1x1x8x8xbf16>
    tpu.vector_store %arg8[%c0_78, %c3_79, %c0_80, %c0_81], %61 {strides = array<i32>} : memref<1x4x8x8xbf16, #tpu.memory_space<vmem>>, vector<1x1x8x8xbf16>,
    return
  }
  func.func @transform_0(%arg0: i32, %arg1: i32) -> (i32, i32, i32) {
    %c0_i32 = arith.constant 0 : i32
    %c0_i32_0 = arith.constant 0 : i32
    return %arg0, %arg1, %c0_i32 : i32, i32, i32
  }
  func.func @transform_1(%arg0: i32, %arg1: i32) -> (i32, i32) {
    %c0_i32 = arith.constant 0 : i32
    %c0_i32_0 = arith.constant 0 : i32
    %c0_i32_1 = arith.constant 0 : i32
    return %c0_i32, %c0_i32_0 : i32, i32
  }
  func.func @transform_2(%arg0: i32, %arg1: i32) -> (i32, i32) {
    %c0_i32 = arith.constant 0 : i32
    %c0_i32_0 = arith.constant 0 : i32
    %c0_i32_1 = arith.constant 0 : i32
    return %c0_i32, %c0_i32_0 : i32, i32
  }
  func.func @transform_3(%arg0: i32, %arg1: i32) -> (i32, i32) {
    %c0_i32 = arith.constant 0 : i32
    %c0_i32_0 = arith.constant 0 : i32
    %c0_i32_1 = arith.constant 0 : i32
    return %c0_i32, %c0_i32_0 : i32, i32
  }
  func.func @transform_4(%arg0: i32, %arg1: i32) -> (i32, i32, i32, i32) {
    %c0_i32 = arith.constant 0 : i32
    %c0_i32_0 = arith.constant 0 : i32
    %c0_i32_1 = arith.constant 0 : i32
    return %arg0, %c0_i32, %arg1, %c0_i32_0 : i32, i32, i32, i32
  }
  func.func @transform_5(%arg0: i32, %arg1: i32) -> (i32, i32, i32, i32) {
    %c0_i32 = arith.constant 0 : i32
    %c0_i32_0 = arith.constant 0 : i32
    %c0_i32_1 = arith.constant 0 : i32
    return %arg0, %c0_i32, %arg1, %c0_i32_0 : i32, i32, i32, i32
  }
  func.func @transform_6(%arg0: i32, %arg1: i32) -> (i32, i32, i32, i32) {
    %c0_i32 = arith.constant 0 : i32
    %c0_i32_0 = arith.constant 0 : i32
    %c0_i32_1 = arith.constant 0 : i32
    return %arg0, %c0_i32, %arg1, %c0_i32_0 : i32, i32, i32, i32
  }
}

module attributes {stable_mosaic.version = 11 : i64} {
  func.func @_qkv_proj_kernel(%arg0: i32, %arg1: i32, %arg2: memref<1x8x32xbf16, #tpu.memory_space<vmem>>, %arg3: memref<32x32xbf16, #tpu.memory_space<vmem>>, %arg4: memref<32x32xbf16, #tpu.memory_space<vmem>>, %arg5: memref<32x32xbf16, #tpu.memory_space<vmem>>, %arg6: memref<1x4x8x8xbf16, #tpu.memory_space<vmem>>, %arg7: memref<1x4x8x8xbf16, #tpu.memory_space<vmem>>, %arg8: memref<1x4x8x8xbf16, #tpu.memory_space<vmem>>, %arg9: memref<8x32xbf16, #tpu.memory_space<vmem>>) attributes {dimension_semantics = [#tpu.dimension_semantics<parallel>, #tpu.dimension_semantics<parallel>], iteration_bounds = array<i64: 2, 1>, scalar_prefetch = 0 : i64, scratch_operands = 1 : i64, tpu.core_type = #tpu.core_type<tc>, window_params = [{transform_indices = @transform_0, window_bounds = array<i64: 1, 8, 32>}, {pipeline_mode = #tpu.pipeline_mode<synchronous>, transform_indices = @transform_1, window_bounds = array<i64: 32, 32>}, {pipeline_mode = #tpu.pipeline_mode<synchronous>, transform_indices = @transform_2, window_bounds = array<i64: 32, 32>}, {pipeline_mode = #tpu.pipeline_mode<synchronous>, transform_indices = @transform_3, window_bounds = array<i64: 32, 32>}, {transform_indices = @transform_4, window_bounds = array<i64: 1, 4, 8, 8>}, {transform_indices = @transform_5, window_bounds = array<i64: 1, 4, 8, 8>}, {transform_indices = @transform_6, window_bounds = array<i64: 1, 4, 8, 8>}]} {
    %c0 = arith.constant 0 : index
    %c0_0 = arith.constant 0 : index
    %c0_1 = arith.constant 0 : index
    %0 = vector.load %arg2[%c0, %c0_0, %c0_1] : memref<1x8x32xbf16, #tpu.memory_space<vmem>>, vector<1x8x32xbf16>
    %1 = vector.shape_cast %0 : vector<1x8x32xbf16> to vector<8x32xbf16>
    %c0_2 = arith.constant 0 : index
    %c0_3 = arith.constant 0 : index
    %2 = vector.load %arg3[%c0_2, %c0_3] : memref<32x32xbf16, #tpu.memory_space<vmem>>, vector<32x32xbf16>
    %cst = arith.constant dense<0.000000e+00> : vector<8x32xf32>
    %3 = tpu.matmul %1, %2, %cst {dimension_numbers = #tpu.dot_dimension_numbers<[1], [0], [0], [1], [0, 0, 1, 1], [], []>} : vector<8x32xbf16>, vector<32x32xbf16>, vector<8x32xf32> -> vector<8x32xf32>
    %4 = arith.truncf %3 : vector<8x32xf32> to vector<8x32xbf16>
    %c0_4 = arith.constant 0 : index
    %c0_5 = arith.constant 0 : index
    %5 = vector.load %arg9[%c0_4, %c0_5] : memref<8x32xbf16, #tpu.memory_space<vmem>>, vector<8x32xbf16>
    tpu.vector_store %arg9[%c0_4, %c0_5], %4 {strides = array<i32>} : memref<8x32xbf16, #tpu.memory_space<vmem>>, vector<8x32xbf16>,
    %c0_6 = arith.constant 0 : index
    %c0_7 = arith.constant 0 : index
    %6 = vector.load %arg9[%c0_6, %c0_7] : memref<8x32xbf16, #tpu.memory_space<vmem>>, vector<8x8xbf16>
    %c0_8 = arith.constant 0 : index
    %c0_9 = arith.constant 0 : index
    %c0_10 = arith.constant 0 : index
    %c0_11 = arith.constant 0 : index
    %7 = vector.load %arg6[%c0_8, %c0_9, %c0_10, %c0_11] : memref<1x4x8x8xbf16, #tpu.memory_space<vmem>>, vector<1x1x8x8xbf16>
    %8 = vector.shape_cast %7 : vector<1x1x8x8xbf16> to vector<8x8xbf16>
    %9 = vector.shape_cast %6 : vector<8x8xbf16> to vector<1x1x8x8xbf16>
    tpu.vector_store %arg6[%c0_8, %c0_9, %c0_10, %c0_11], %9 {strides = array<i32>} : memref<1x4x8x8xbf16, #tpu.memory_space<vmem>>, vector<1x1x8x8xbf16>,
    %c0_12 = arith.constant 0 : index
    %c8 = arith.constant 8 : index
    %10 = vector.load %arg9[%c0_12, %c8] : memref<8x32xbf16, #tpu.memory_space<vmem>>, vector<8x8xbf16>
    %c0_13 = arith.constant 0 : index
    %c1 = arith.constant 1 : index
    %c0_14 = arith.constant 0 : index
    %c0_15 = arith.constant 0 : index
    %11 = vector.load %arg6[%c0_13, %c1, %c0_14, %c0_15] : memref<1x4x8x8xbf16, #tpu.memory_space<vmem>>, vector<1x1x8x8xbf16>
    %12 = vector.shape_cast %11 : vector<1x1x8x8xbf16> to vector<8x8xbf16>
    %13 = vector.shape_cast %10 : vector<8x8xbf16> to vector<1x1x8x8xbf16>
    tpu.vector_store %arg6[%c0_13, %c1, %c0_14, %c0_15], %13 {strides = array<i32>} : memref<1x4x8x8xbf16, #tpu.memory_space<vmem>>, vector<1x1x8x8xbf16>,
    %c0_16 = arith.constant 0 : index
    %c16 = arith.constant 16 : index
    %14 = vector.load %arg9[%c0_16, %c16] : memref<8x32xbf16, #tpu.memory_space<vmem>>, vector<8x8xbf16>
    %c0_17 = arith.constant 0 : index
    %c2 = arith.constant 2 : index
    %c0_18 = arith.constant 0 : index
    %c0_19 = arith.constant 0 : index
    %15 = vector.load %arg6[%c0_17, %c2, %c0_18, %c0_19] : memref<1x4x8x8xbf16, #tpu.memory_space<vmem>>, vector<1x1x8x8xbf16>
    %16 = vector.shape_cast %15 : vector<1x1x8x8xbf16> to vector<8x8xbf16>
    %17 = vector.shape_cast %14 : vector<8x8xbf16> to vector<1x1x8x8xbf16>
    tpu.vector_store %arg6[%c0_17, %c2, %c0_18, %c0_19], %17 {strides = array<i32>} : memref<1x4x8x8xbf16, #tpu.memory_space<vmem>>, vector<1x1x8x8xbf16>,
    %c0_20 = arith.constant 0 : index
    %c24 = arith.constant 24 : index
    %18 = vector.load %arg9[%c0_20, %c24] : memref<8x32xbf16, #tpu.memory_space<vmem>>, vector<8x8xbf16>
    %c0_21 = arith.constant 0 : index
    %c3 = arith.constant 3 : index
    %c0_22 = arith.constant 0 : index
    %c0_23 = arith.constant 0 : index
    %19 = vector.load %arg6[%c0_21, %c3, %c0_22, %c0_23] : memref<1x4x8x8xbf16, #tpu.memory_space<vmem>>, vector<1x1x8x8xbf16>
    %20 = vector.shape_cast %19 : vector<1x1x8x8xbf16> to vector<8x8xbf16>
    %21 = vector.shape_cast %18 : vector<8x8xbf16> to vector<1x1x8x8xbf16>
    tpu.vector_store %arg6[%c0_21, %c3, %c0_22, %c0_23], %21 {strides = array<i32>} : memref<1x4x8x8xbf16, #tpu.memory_space<vmem>>, vector<1x1x8x8xbf16>,
    %c0_24 = arith.constant 0 : index
    %c0_25 = arith.constant 0 : index
    %22 = vector.load %arg4[%c0_24, %c0_25] : memref<32x32xbf16, #tpu.memory_space<vmem>>, vector<32x32xbf16>
    %cst_26 = arith.constant dense<0.000000e+00> : vector<8x32xf32>
    %23 = tpu.matmul %1, %22, %cst_26 {dimension_numbers = #tpu.dot_dimension_numbers<[1], [0], [0], [1], [0, 0, 1, 1], [], []>} : vector<8x32xbf16>, vector<32x32xbf16>, vector<8x32xf32> -> vector<8x32xf32>
    %24 = arith.truncf %23 : vector<8x32xf32> to vector<8x32xbf16>
    %c0_27 = arith.constant 0 : index
    %c0_28 = arith.constant 0 : index
    %25 = vector.load %arg9[%c0_27, %c0_28] : memref<8x32xbf16, #tpu.memory_space<vmem>>, vector<8x32xbf16>
    tpu.vector_store %arg9[%c0_27, %c0_28], %24 {strides = array<i32>} : memref<8x32xbf16, #tpu.memory_space<vmem>>, vector<8x32xbf16>,
    %c0_29 = arith.constant 0 : index
    %c0_30 = arith.constant 0 : index
    %26 = vector.load %arg9[%c0_29, %c0_30] : memref<8x32xbf16, #tpu.memory_space<vmem>>, vector<8x8xbf16>
    %c0_31 = arith.constant 0 : index
    %c0_32 = arith.constant 0 : index
    %c0_33 = arith.constant 0 : index
    %c0_34 = arith.constant 0 : index
    %27 = vector.load %arg7[%c0_31, %c0_32, %c0_33, %c0_34] : memref<1x4x8x8xbf16, #tpu.memory_space<vmem>>, vector<1x1x8x8xbf16>
    %28 = vector.shape_cast %27 : vector<1x1x8x8xbf16> to vector<8x8xbf16>
    %29 = vector.shape_cast %26 : vector<8x8xbf16> to vector<1x1x8x8xbf16>
    tpu.vector_store %arg7[%c0_31, %c0_32, %c0_33, %c0_34], %29 {strides = array<i32>} : memref<1x4x8x8xbf16, #tpu.memory_space<vmem>>, vector<1x1x8x8xbf16>,
    %c0_35 = arith.constant 0 : index
    %c8_36 = arith.constant 8 : index
    %30 = vector.load %arg9[%c0_35, %c8_36] : memref<8x32xbf16, #tpu.memory_space<vmem>>, vector<8x8xbf16>
    %c0_37 = arith.constant 0 : index
    %c1_38 = arith.constant 1 : index
    %c0_39 = arith.constant 0 : index
    %c0_40 = arith.constant 0 : index
    %31 = vector.load %arg7[%c0_37, %c1_38, %c0_39, %c0_40] : memref<1x4x8x8xbf16, #tpu.memory_space<vmem>>, vector<1x1x8x8xbf16>
    %32 = vector.shape_cast %31 : vector<1x1x8x8xbf16> to vector<8x8xbf16>
    %33 = vector.shape_cast %30 : vector<8x8xbf16> to vector<1x1x8x8xbf16>
    tpu.vector_store %arg7[%c0_37, %c1_38, %c0_39, %c0_40], %33 {strides = array<i32>} : memref<1x4x8x8xbf16, #tpu.memory_space<vmem>>, vector<1x1x8x8xbf16>,
    %c0_41 = arith.constant 0 : index
    %c16_42 = arith.constant 16 : index
    %34 = vector.load %arg9[%c0_41, %c16_42] : memref<8x32xbf16, #tpu.memory_space<vmem>>, vector<8x8xbf16>
    %c0_43 = arith.constant 0 : index
    %c2_44 = arith.constant 2 : index
    %c0_45 = arith.constant 0 : index
    %c0_46 = arith.constant 0 : index
    %35 = vector.load %arg7[%c0_43, %c2_44, %c0_45, %c0_46] : memref<1x4x8x8xbf16, #tpu.memory_space<vmem>>, vector<1x1x8x8xbf16>
    %36 = vector.shape_cast %35 : vector<1x1x8x8xbf16> to vector<8x8xbf16>
    %37 = vector.shape_cast %34 : vector<8x8xbf16> to vector<1x1x8x8xbf16>
    tpu.vector_store %arg7[%c0_43, %c2_44, %c0_45, %c0_46], %37 {strides = array<i32>} : memref<1x4x8x8xbf16, #tpu.memory_space<vmem>>, vector<1x1x8x8xbf16>,
    %c0_47 = arith.constant 0 : index
    %c24_48 = arith.constant 24 : index
    %38 = vector.load %arg9[%c0_47, %c24_48] : memref<8x32xbf16, #tpu.memory_space<vmem>>, vector<8x8xbf16>
    %c0_49 = arith.constant 0 : index
    %c3_50 = arith.constant 3 : index
    %c0_51 = arith.constant 0 : index
    %c0_52 = arith.constant 0 : index
    %39 = vector.load %arg7[%c0_49, %c3_50, %c0_51, %c0_52] : memref<1x4x8x8xbf16, #tpu.memory_space<vmem>>, vector<1x1x8x8xbf16>
    %40 = vector.shape_cast %39 : vector<1x1x8x8xbf16> to vector<8x8xbf16>
    %41 = vector.shape_cast %38 : vector<8x8xbf16> to vector<1x1x8x8xbf16>
    tpu.vector_store %arg7[%c0_49, %c3_50, %c0_51, %c0_52], %41 {strides = array<i32>} : memref<1x4x8x8xbf16, #tpu.memory_space<vmem>>, vector<1x1x8x8xbf16>,
    %c0_53 = arith.constant 0 : index
    %c0_54 = arith.constant 0 : index
    %42 = vector.load %arg5[%c0_53, %c0_54] : memref<32x32xbf16, #tpu.memory_space<vmem>>, vector<32x32xbf16>
    %cst_55 = arith.constant dense<0.000000e+00> : vector<8x32xf32>
    %43 = tpu.matmul %1, %42, %cst_55 {dimension_numbers = #tpu.dot_dimension_numbers<[1], [0], [0], [1], [0, 0, 1, 1], [], []>} : vector<8x32xbf16>, vector<32x32xbf16>, vector<8x32xf32> -> vector<8x32xf32>
    %44 = arith.truncf %43 : vector<8x32xf32> to vector<8x32xbf16>
    %c0_56 = arith.constant 0 : index
    %c0_57 = arith.constant 0 : index
    %45 = vector.load %arg9[%c0_56, %c0_57] : memref<8x32xbf16, #tpu.memory_space<vmem>>, vector<8x32xbf16>
    tpu.vector_store %arg9[%c0_56, %c0_57], %44 {strides = array<i32>} : memref<8x32xbf16, #tpu.memory_space<vmem>>, vector<8x32xbf16>,
    %c0_58 = arith.constant 0 : index
    %c0_59 = arith.constant 0 : index
    %46 = vector.load %arg9[%c0_58, %c0_59] : memref<8x32xbf16, #tpu.memory_space<vmem>>, vector<8x8xbf16>
    %c0_60 = arith.constant 0 : index
    %c0_61 = arith.constant 0 : index
    %c0_62 = arith.constant 0 : index
    %c0_63 = arith.constant 0 : index
    %47 = vector.load %arg8[%c0_60, %c0_61, %c0_62, %c0_63] : memref<1x4x8x8xbf16, #tpu.memory_space<vmem>>, vector<1x1x8x8xbf16>
    %48 = vector.shape_cast %47 : vector<1x1x8x8xbf16> to vector<8x8xbf16>
    %49 = vector.shape_cast %46 : vector<8x8xbf16> to vector<1x1x8x8xbf16>
    tpu.vector_store %arg8[%c0_60, %c0_61, %c0_62, %c0_63], %49 {strides = array<i32>} : memref<1x4x8x8xbf16, #tpu.memory_space<vmem>>, vector<1x1x8x8xbf16>,
    %c0_64 = arith.constant 0 : index
    %c8_65 = arith.constant 8 : index
    %50 = vector.load %arg9[%c0_64, %c8_65] : memref<8x32xbf16, #tpu.memory_space<vmem>>, vector<8x8xbf16>
    %c0_66 = arith.constant 0 : index
    %c1_67 = arith.constant 1 : index
    %c0_68 = arith.constant 0 : index
    %c0_69 = arith.constant 0 : index
    %51 = vector.load %arg8[%c0_66, %c1_67, %c0_68, %c0_69] : memref<1x4x8x8xbf16, #tpu.memory_space<vmem>>, vector<1x1x8x8xbf16>
    %52 = vector.shape_cast %51 : vector<1x1x8x8xbf16> to vector<8x8xbf16>
    %53 = vector.shape_cast %50 : vector<8x8xbf16> to vector<1x1x8x8xbf16>
    tpu.vector_store %arg8[%c0_66, %c1_67, %c0_68, %c0_69], %53 {strides = array<i32>} : memref<1x4x8x8xbf16, #tpu.memory_space<vmem>>, vector<1x1x8x8xbf16>,
    %c0_70 = arith.constant 0 : index
    %c16_71 = arith.constant 16 : index
    %54 = vector.load %arg9[%c0_70, %c16_71] : memref<8x32xbf16, #tpu.memory_space<vmem>>, vector<8x8xbf16>
    %c0_72 = arith.constant 0 : index
    %c2_73 = arith.constant 2 : index
    %c0_74 = arith.constant 0 : index
    %c0_75 = arith.constant 0 : index
    %55 = vector.load %arg8[%c0_72, %c2_73, %c0_74, %c0_75] : memref<1x4x8x8xbf16, #tpu.memory_space<vmem>>, vector<1x1x8x8xbf16>
    %56 = vector.shape_cast %55 : vector<1x1x8x8xbf16> to vector<8x8xbf16>
    %57 = vector.shape_cast %54 : vector<8x8xbf16> to vector<1x1x8x8xbf16>
    tpu.vector_store %arg8[%c0_72, %c2_73, %c0_74, %c0_75], %57 {strides = array<i32>} : memref<1x4x8x8xbf16, #tpu.memory_space<vmem>>, vector<1x1x8x8xbf16>,
    %c0_76 = arith.constant 0 : index
    %c24_77 = arith.constant 24 : index
    %58 = vector.load %arg9[%c0_76, %c24_77] : memref<8x32xbf16, #tpu.memory_space<vmem>>, vector<8x8xbf16>
    %c0_78 = arith.constant 0 : index
    %c3_79 = arith.constant 3 : index
    %c0_80 = arith.constant 0 : index
    %c0_81 = arith.constant 0 : index
    %59 = vector.load %arg8[%c0_78, %c3_79, %c0_80, %c0_81] : memref<1x4x8x8xbf16, #tpu.memory_space<vmem>>, vector<1x1x8x8xbf16>
    %60 = vector.shape_cast %59 : vector<1x1x8x8xbf16> to vector<8x8xbf16>
    %61 = vector.shape_cast %58 : vector<8x8xbf16> to vector<1x1x8x8xbf16>
    tpu.vector_store %arg8[%c0_78, %c3_79, %c0_80, %c0_81], %61 {strides = array<i32>} : memref<1x4x8x8xbf16, #tpu.memory_space<vmem>>, vector<1x1x8x8xbf16>,
    return
  }
  func.func @transform_0(%arg0: i32, %arg1: i32) -> (i32, i32, i32) {
    %c0_i32 = arith.constant 0 : i32
    %c0_i32_0 = arith.constant 0 : i32
    return %arg0, %arg1, %c0_i32 : i32, i32, i32
  }
  func.func @transform_1(%arg0: i32, %arg1: i32) -> (i32, i32) {
    %c0_i32 = arith.constant 0 : i32
    %c0_i32_0 = arith.constant 0 : i32
    %c0_i32_1 = arith.constant 0 : i32
    return %c0_i32, %c0_i32_0 : i32, i32
  }
  func.func @transform_2(%arg0: i32, %arg1: i32) -> (i32, i32) {
    %c0_i32 = arith.constant 0 : i32
    %c0_i32_0 = arith.constant 0 : i32
    %c0_i32_1 = arith.constant 0 : i32
    return %c0_i32, %c0_i32_0 : i32, i32
  }
  func.func @transform_3(%arg0: i32, %arg1: i32) -> (i32, i32) {
    %c0_i32 = arith.constant 0 : i32
    %c0_i32_0 = arith.constant 0 : i32
    %c0_i32_1 = arith.constant 0 : i32
    return %c0_i32, %c0_i32_0 : i32, i32
  }
  func.func @transform_4(%arg0: i32, %arg1: i32) -> (i32, i32, i32, i32) {
    %c0_i32 = arith.constant 0 : i32
    %c0_i32_0 = arith.constant 0 : i32
    %c0_i32_1 = arith.constant 0 : i32
    return %arg0, %c0_i32, %arg1, %c0_i32_0 : i32, i32, i32, i32
  }
  func.func @transform_5(%arg0: i32, %arg1: i32) -> (i32, i32, i32, i32) {
    %c0_i32 = arith.constant 0 : i32
    %c0_i32_0 = arith.constant 0 : i32
    %c0_i32_1 = arith.constant 0 : i32
    return %arg0, %c0_i32, %arg1, %c0_i32_0 : i32, i32, i32, i32
  }
  func.func @transform_6(%arg0: i32, %arg1: i32) -> (i32, i32, i32, i32) {
    %c0_i32 = arith.constant 0 : i32
    %c0_i32_0 = arith.constant 0 : i32
    %c0_i32_1 = arith.constant 0 : i32
    return %arg0, %c0_i32, %arg1, %c0_i32_0 : i32, i32, i32, i32
  }
}

</mosaic_0001>

<llo_original>
// kernel: tpu_custom_call.1
$region0: #{tpu_custom_call.1}
  #allocation0 [shape = 'u32[]', space=smem, size = 0x4, offset = 0x4, fixed_abs, tag = 'smem constant byte address 0x4 - core index']
  #allocation1 [shape = 'u32[144,128]{1,0:T(1,128)}', space=vmem, size = 0x12000, scoped, tag = 'internal scratch']
  #allocation2 [shape = 'bf16[8,32]{1,0:T(8,128)(2,1)}', space=vmem, size = 0x800, scoped, tag = 'scratch operand']
  %s0 = inlined_call_operand.hbm [shape: bf16[2,8,32], index: 0, kind: input, shape index: {}]
  %s1 = inlined_call_operand.hbm [shape: bf16[32,32], index: 1, kind: input, shape index: {}]
  %s2 = inlined_call_operand.hbm [shape: bf16[32,32], index: 2, kind: input, shape index: {}]
  %s3 = inlined_call_operand.hbm [shape: bf16[32,32], index: 3, kind: input, shape index: {}]
  %s4 = inlined_call_operand.hbm [shape: bf16[2,4,8,8], index: 4, kind: output, shape index: {0}]
  %s5 = inlined_call_operand.hbm [shape: bf16[2,4,8,8], index: 5, kind: output, shape index: {1}]
  %s6 = inlined_call_operand.hbm [shape: bf16[2,4,8,8], index: 6, kind: output, shape index: {2}]
  %7 = xla_tuple %s4, %s5, %s6
  %s8 = sld [smem:[#allocation0]]
  $region81: #{tpu_custom_call.1} parent=0
    _
  %s10 = ssub.s32 1, %s8
  %s11 = scalar_select 0, %s10, %s8
  $region1: #{tpu_custom_call.1} parent=0
    #allocation3 [shape = 'u8[4096]{0}', space=vmem, size = 0x1000, scoped, tag = 'input window, operand 0']
    #allocation4 [shape = 's32[2]{0}', space=sflag, size = 0x8, scoped, tag = 'scoped memory for tpu_custom_call.1']
    #allocation5 [shape = 's32[2]{0}', space=sflag, size = 0x8, scoped, tag = 'scoped memory for tpu_custom_call.1']
    #allocation6 [shape = 'u8[8192]{0}', space=vmem, size = 0x2000, scoped, tag = 'input window, operand 1, single buffered']
    #allocation7 [shape = 's32[1]{0}', space=sflag, size = 0x4, scoped, tag = 'scoped memory for tpu_custom_call.1']
    #allocation8 [shape = 'u8[8192]{0}', space=vmem, size = 0x2000, scoped, tag = 'input window, operand 2, single buffered']
    #allocation9 [shape = 'u8[8192]{0}', space=vmem, size = 0x2000, scoped, tag = 'input window, operand 3, single buffered']
    #allocation10 [shape = 's32[1]{0}', space=sflag, size = 0x4, scoped, tag = 'scoped memory for tpu_custom_call.1']
    #allocation11 [shape = 'u8[16384]{0}', space=vmem, size = 0x4000, scoped, tag = 'output window, operand 0']
    #allocation12 [shape = 'u8[16384]{0}', space=vmem, size = 0x4000, scoped, tag = 'output window, operand 1']
    #allocation13 [shape = 's32[2]{0}', space=sflag, size = 0x8, scoped, tag = 'scoped memory for tpu_custom_call.1']
    #allocation14 [shape = 'u8[16384]{0}', space=vmem, size = 0x4000, scoped, tag = 'output window, operand 2']
    %12 = vsyncpa [#allocation4], 0
    %s13 = scalar_lea.sflag [#allocation4], 1
    %14 = vsyncpa %s13, 0
    %15 = vsyncpa [#allocation7], 0
    %16 = vsyncpa [#allocation10], 0
    %17 = vsyncpa [#allocation5], 0
    %s18 = scalar_lea.sflag [#allocation5], 1
    %19 = vsyncpa %s18, 0
    %20 = vsyncpa [#allocation13], 0
    %s21 = scalar_lea.sflag [#allocation13], 1
    %22 = vsyncpa %s21, 0
    loop: start=0, step=1, limit=4
    $region2: #{tpu_custom_call.1} parent=1 // loop_pre_header
      _
    $region3: #{tpu_custom_call.1} parent=1 // loop_header
      %s24 = sphi 0, %s28
      %p25 = scmp.ge.s32.totalorder %s24, 4
      %s31 = sphi 0, %s43
      %s32 = sphi 0, %s39
      %s33 = sphi 0, %s31
      %s34 = sphi 0, %s32
      %s35 = sphi 0, %s33
      %s36 = sphi 0, %s34
      %s48 = sphi 0, %s50
      %s51 = sphi 0, %s48
      %s52 = sphi 0, %s51
      %s68 = sphi 0, %s52
      %s72 = sphi 0, %s72
      %s74 = sphi 0, %s72
      %s75 = sphi 0, %s74
      %s89 = sphi 0, %s75
      %s93 = sphi 0, %s93
      %s95 = sphi 0, %s93
      %s96 = sphi 0, %s95
      %s110 = sphi 0, %s96
      %s114 = sphi 0, %s114
      %s116 = sphi 0, %s114
      %s117 = sphi 0, %s116
      %s131 = sphi 0, %s117
      %s139 = sphi 0, %s141
      %s142 = sphi 0, %s139
      %s143 = sphi 0, %s142
      %s159 = sphi 0, %s143
      %s167 = sphi 0, %s169
      %s170 = sphi 0, %s167
      %s171 = sphi 0, %s170
      %s187 = sphi 0, %s171
      %s195 = sphi 0, %s197
      %s198 = sphi 0, %s195
      %s199 = sphi 0, %s198
      %s215 = sphi 0, %s199
    $region4: #{tpu_custom_call.1} parent=1 // loop_header_branch
      %27 = sbr.rel (%p25) target = $region8
    $region5: #{tpu_custom_call.1} parent=1 // loop_body
      %s29 = ssub.s32 %s24, 1
      %s30 = ssub.s32 %s24, 2
      %s37 = sadd.s32 1, %s32
      %p38 = scmp.ge.s32.totalorder %s37, 1
      %s39 = scalar_select %p38, 0, %s37
      %s40 = sadd.s32 1, %s31
      %s41 = scalar_select %p38, %s40, %s31
      %p42 = scmp.ge.s32.totalorder %s41, 2
      %s43 = scalar_select %p42, 0, %s41
      %s44 = ssub.s32 %s31, %s43
      %s45 = ssub.s32 %s32, %s39
      %s46 = sor.u32 %s44, %s45
      %p47 = scmp.eq.s32.totalorder %s46, 0
      %s49 = sadd.s32 %s48, 1
      %s50 = scalar_select %p47, %s48, %s49
      %p53 = pneg %p47
      %p54 = scmp.eq.s32.totalorder %s24, 1
      %p55 = por %p53, %p54
      %p56 = scmp.ne.s32.totalorder %s48, %s51
      %p57 = scmp.eq.s32.totalorder %s24, 0
      %p58 = por %p56, %p57
      %p59 = scmp.ne.s32.totalorder %s48, %s51
      %p60 = scmp.eq.s32.totalorder %s29, 1
      %p61 = por %p59, %p60
      %p62 = scmp.ne.s32.totalorder %s51, %s52
      %p63 = scmp.eq.s32.totalorder %s29, 0
      %p64 = por %p62, %p63
      %p65 = scmp.ne.s32.totalorder %s51, %s52
      %p66 = scmp.eq.s32.totalorder %s30, 1
      %p67 = por %p65, %p66
      %p69 = scmp.ne.s32.totalorder %s52, %s68
      %p70 = scmp.eq.s32.totalorder %s30, 0
      %p71 = por %p69, %p70
      %s73 = sadd.s32 %s72, 1
      %p76 = scmp.eq.s32.totalorder %s24, 1
      %p77 = scmp.ne.s32.totalorder %s72, %s74
      %p78 = scmp.eq.s32.totalorder %s24, 0
      %p79 = por %p77, %p78
      %p80 = scmp.ne.s32.totalorder %s72, %s74
      %p81 = scmp.eq.s32.totalorder %s29, 1
      %p82 = por %p80, %p81
      %p83 = scmp.ne.s32.totalorder %s74, %s75
      %p84 = scmp.eq.s32.totalorder %s29, 0
      %p85 = por %p83, %p84
      %p86 = scmp.ne.s32.totalorder %s74, %s75
      %p87 = scmp.eq.s32.totalorder %s30, 1
      %p88 = por %p86, %p87
      %p90 = scmp.ne.s32.totalorder %s75, %s89
      %p91 = scmp.eq.s32.totalorder %s30, 0
      %p92 = por %p90, %p91
      %s94 = sadd.s32 %s93, 1
      %p97 = scmp.eq.s32.totalorder %s24, 1
      %p98 = scmp.ne.s32.totalorder %s93, %s95
      %p99 = scmp.eq.s32.totalorder %s24, 0
      %p100 = por %p98, %p99
      %p101 = scmp.ne.s32.totalorder %s93, %s95
      %p102 = scmp.eq.s32.totalorder %s29, 1
      %p103 = por %p101, %p102
      %p104 = scmp.ne.s32.totalorder %s95, %s96
      %p105 = scmp.eq.s32.totalorder %s29, 0
      %p106 = por %p104, %p105
      %p107 = scmp.ne.s32.totalorder %s95, %s96
      %p108 = scmp.eq.s32.totalorder %s30, 1
      %p109 = por %p107, %p108
      %p111 = scmp.ne.s32.totalorder %s96, %s110
      %p112 = scmp.eq.s32.totalorder %s30, 0
      %p113 = por %p111, %p112
      %s115 = sadd.s32 %s114, 1
      %p118 = scmp.eq.s32.totalorder %s24, 1
      %p119 = scmp.ne.s32.totalorder %s114, %s116
      %p120 = scmp.eq.s32.totalorder %s24, 0
      %p121 = por %p119, %p120
      %p122 = scmp.ne.s32.totalorder %s114, %s116
      %p123 = scmp.eq.s32.totalorder %s29, 1
      %p124 = por %p122, %p123
      %p125 = scmp.ne.s32.totalorder %s116, %s117
      %p126 = scmp.eq.s32.totalorder %s29, 0
      %p127 = por %p125, %p126
      %p128 = scmp.ne.s32.totalorder %s116, %s117
      %p129 = scmp.eq.s32.totalorder %s30, 1
      %p130 = por %p128, %p129
      %p132 = scmp.ne.s32.totalorder %s117, %s131
      %p133 = scmp.eq.s32.totalorder %s30, 0
      %p134 = por %p132, %p133
      %s135 = ssub.s32 %s31, %s43
      %s136 = ssub.s32 %s32, %s39
      %s137 = sor.u32 %s135, %s136
      %p138 = scmp.eq.s32.totalorder %s137, 0
      %s140 = sadd.s32 %s139, 1
      %s141 = scalar_select %p138, %s139, %s140
      %p144 = pneg %p138
      %p145 = scmp.eq.s32.totalorder %s24, 1
      %p146 = por %p144, %p145
      %p147 = scmp.ne.s32.totalorder %s139, %s142
      %p148 = scmp.eq.s32.totalorder %s24, 0
      %p149 = por %p147, %p148
      %p150 = scmp.ne.s32.totalorder %s139, %s142
      %p151 = scmp.eq.s32.totalorder %s29, 1
      %p152 = por %p150, %p151
      %p153 = scmp.ne.s32.totalorder %s142, %s143
      %p154 = scmp.eq.s32.totalorder %s29, 0
      %p155 = por %p153, %p154
      %p156 = scmp.ne.s32.totalorder %s142, %s143
      %p157 = scmp.eq.s32.totalorder %s30, 1
      %p158 = por %p156, %p157
      %p160 = scmp.ne.s32.totalorder %s143, %s159
      %p161 = scmp.eq.s32.totalorder %s30, 0
      %p162 = por %p160, %p161
      %s163 = ssub.s32 %s31, %s43
      %s164 = ssub.s32 %s32, %s39
      %s165 = sor.u32 %s163, %s164
      %p166 = scmp.eq.s32.totalorder %s165, 0
      %s168 = sadd.s32 %s167, 1
      %s169 = scalar_select %p166, %s167, %s168
      %p172 = pneg %p166
      %p173 = scmp.eq.s32.totalorder %s24, 1
      %p174 = por %p172, %p173
      %p175 = scmp.ne.s32.totalorder %s167, %s170
      %p176 = scmp.eq.s32.totalorder %s24, 0
      %p177 = por %p175, %p176
      %p178 = scmp.ne.s32.totalorder %s167, %s170
      %p179 = scmp.eq.s32.totalorder %s29, 1
      %p180 = por %p178, %p179
      %p181 = scmp.ne.s32.totalorder %s170, %s171
      %p182 = scmp.eq.s32.totalorder %s29, 0
      %p183 = por %p181, %p182
      %p184 = scmp.ne.s32.totalorder %s170, %s171
      %p185 = scmp.eq.s32.totalorder %s30, 1
      %p186 = por %p184, %p185
      %p188 = scmp.ne.s32.totalorder %s171, %s187
      %p189 = scmp.eq.s32.totalorder %s30, 0
      %p190 = por %p188, %p189
      %s191 = ssub.s32 %s31, %s43
      %s192 = ssub.s32 %s32, %s39
      %s193 = sor.u32 %s191, %s192
      %p194 = scmp.eq.s32.totalorder %s193, 0
      %s196 = sadd.s32 %s195, 1
      %s197 = scalar_select %p194, %s195, %s196
      %p200 = pneg %p194
      %p201 = scmp.eq.s32.totalorder %s24, 1
      %p202 = por %p200, %p201
      %p203 = scmp.ne.s32.totalorder %s195, %s198
      %p204 = scmp.eq.s32.totalorder %s24, 0
      %p205 = por %p203, %p204
      %p206 = scmp.ne.s32.totalorder %s195, %s198
      %p207 = scmp.eq.s32.totalorder %s29, 1
      %p208 = por %p206, %p207
      %p209 = scmp.ne.s32.totalorder %s198, %s199
      %p210 = scmp.eq.s32.totalorder %s29, 0
      %p211 = por %p209, %p210
      %p212 = scmp.ne.s32.totalorder %s198, %s199
      %p213 = scmp.eq.s32.totalorder %s30, 1
      %p214 = por %p212, %p213
      %p216 = scmp.ne.s32.totalorder %s199, %s215
      %p217 = scmp.eq.s32.totalorder %s30, 0
      %p218 = por %p216, %p217
      %p219 = scmp.le.s32.totalorder 1, %s24
      %p220 = scmp.lt.s32.totalorder %s24, 3
      %p221 = pnand %p219, %p220
      %p222 = pneg %p221
      // Predicated region
      $region9: #{tpu_custom_call.1} parent=5 // pred_check
        _
      $region10: #{tpu_custom_call.1} parent=5 // pred_check_branch
        %224 = sbr.rel (%p221) target = $region12
      $region11: #{tpu_custom_call.1} parent=5 // pred_region
        %s225 = ssub.s32 %s24, 1
        // Predicated region
        $region13: #{tpu_custom_call.1} parent=11 // pred_check
          %p226 = pneg %p85
        $region14: #{tpu_custom_call.1} parent=11 // pred_check_branch
          %228 = sbr.rel (%p226) target = $region16
        $region15: #{tpu_custom_call.1} parent=11 // pred_region
          %s230 = ssub.s32 256, 256
          %231 = vsyncadd [#allocation7], %s230
          %s232 = sshll.u32 [#allocation6], 4
          %s233 = int_to_ptr.vmem [resolvable:$true] %s232
          %238 = dma.hbm_to_vmem [thread:$0]  %s1, 256, %s233, [#allocation7], 64, 64, 4
        $region16: #{tpu_custom_call.1} parent=11 // pred_fallthru
          _
        // Predicated region
        $region17: #{tpu_custom_call.1} parent=11 // pred_check
          %p239 = pneg %p106
        $region18: #{tpu_custom_call.1} parent=11 // pred_check_branch
          %241 = sbr.rel (%p239) target = $region20
        $region19: #{tpu_custom_call.1} parent=11 // pred_region
          %s243 = ssub.s32 256, 256
          %244 = vsyncadd [#allocation7], %s243
          %s245 = sshll.u32 [#allocation8], 4
          %s246 = int_to_ptr.vmem [resolvable:$true] %s245
          %251 = dma.hbm_to_vmem [thread:$0]  %s2, 256, %s246, [#allocation7], 64, 64, 4
        $region20: #{tpu_custom_call.1} parent=11 // pred_fallthru
          _
        // Predicated region
        $region21: #{tpu_custom_call.1} parent=11 // pred_check
          %p252 = pneg %p127
        $region22: #{tpu_custom_call.1} parent=11 // pred_check_branch
          %254 = sbr.rel (%p252) target = $region24
        $region23: #{tpu_custom_call.1} parent=11 // pred_region
          %s256 = ssub.s32 256, 256
          %257 = vsyncadd [#allocation10], %s256
          %s258 = sshll.u32 [#allocation9], 4
          %s259 = int_to_ptr.vmem [resolvable:$true] %s258
          %264 = dma.hbm_to_vmem [thread:$0]  %s3, 256, %s259, [#allocation10], 64, 64, 4
        $region24: #{tpu_custom_call.1} parent=11 // pred_fallthru
          _
      $region12: #{tpu_custom_call.1} parent=5 // pred_fallthru
        _
      %p265 = scmp.lt.s32.totalorder %s24, 2
      // Predicated region
      $region25: #{tpu_custom_call.1} parent=5 // pred_check
        %p266 = pneg %p265
      $region26: #{tpu_custom_call.1} parent=5 // pred_check_branch
        %268 = sbr.rel (%p266) target = $region28
      $region27: #{tpu_custom_call.1} parent=5 // pred_region
        // Predicated region
        $region29: #{tpu_custom_call.1} parent=27 // pred_check
          %p269 = pneg %p58
        $region30: #{tpu_custom_call.1} parent=27 // pred_check_branch
          %271 = sbr.rel (%p269) target = $region32
        $region31: #{tpu_custom_call.1} parent=27 // pred_region
          %s272 = sand.u32 %s48, 1
          %s273 = scalar_lea.sflag [#allocation4], %s272
          %s274 = sand.u32 %s48, 1
          %s275 = smul.addr %s274, 4
          %s276 = scalar_lea.vmem [#allocation3], %s275
          %s278 = ssub.s32 64, 64
          %279 = vsyncadd %s273, %s278
          %s280 = sadd.s32 %s32, %s31
          %s281 = smul.addr %s280, 64
          %s282 = scalar_lea.hbm %s0, %s281
          %s284 = sshll.u32 %s276, 4
          %s285 = int_to_ptr.vmem [resolvable:$true] %s284
          %287 = dma.hbm_to_vmem [thread:$0]  %s282, 64, %s285, %s273
        $region32: #{tpu_custom_call.1} parent=27 // pred_fallthru
          _
      $region28: #{tpu_custom_call.1} parent=5 // pred_fallthru
        _
      %p288 = scmp.le.s32.totalorder 1, %s24
      %p289 = scmp.lt.s32.totalorder %s24, 3
      %p290 = pnand %p288, %p289
      %p291 = pneg %p290
      // Predicated region
      $region33: #{tpu_custom_call.1} parent=5 // pred_check
        _
      $region34: #{tpu_custom_call.1} parent=5 // pred_check_branch
        %293 = sbr.rel (%p290) target = $region36
      $region35: #{tpu_custom_call.1} parent=5 // pred_region
        %s294 = ssub.s32 %s24, 1
        %s295 = sand.u32 %s51, 1
        %s296 = scalar_lea.sflag [#allocation4], %s295
        %s297 = sand.u32 %s51, 1
        %s298 = smul.addr %s297, 4
        %s299 = scalar_lea.vmem [#allocation3], %s298
        // Predicated region
        $region37: #{tpu_custom_call.1} parent=35 // pred_check
          %p300 = pneg %p64
        $region38: #{tpu_custom_call.1} parent=35 // pred_check_branch
          %302 = sbr.rel (%p300) target = $region40
        $region39: #{tpu_custom_call.1} parent=35 // pred_region
          %303 = dma.done %s296, 64
        $region40: #{tpu_custom_call.1} parent=35 // pred_fallthru
          _
        // Predicated region
        $region41: #{tpu_custom_call.1} parent=35 // pred_check
          %p304 = pneg %p85
        $region42: #{tpu_custom_call.1} parent=35 // pred_check_branch
          %306 = sbr.rel (%p304) target = $region44
        $region43: #{tpu_custom_call.1} parent=35 // pred_region
          %307 = dma.done [#allocation7], 256
        $region44: #{tpu_custom_call.1} parent=35 // pred_fallthru
          _
        // Predicated region
        $region45: #{tpu_custom_call.1} parent=35 // pred_check
          %p308 = pneg %p106
        $region46: #{tpu_custom_call.1} parent=35 // pred_check_branch
          %310 = sbr.rel (%p308) target = $region48
        $region47: #{tpu_custom_call.1} parent=35 // pred_region
          %311 = dma.done [#allocation7], 256
        $region48: #{tpu_custom_call.1} parent=35 // pred_fallthru
          _
        // Predicated region
        $region49: #{tpu_custom_call.1} parent=35 // pred_check
          %p312 = pneg %p127
        $region50: #{tpu_custom_call.1} parent=35 // pred_check_branch
          %314 = sbr.rel (%p312) target = $region52
        $region51: #{tpu_custom_call.1} parent=35 // pred_region
          %315 = dma.done [#allocation10], 256
        $region52: #{tpu_custom_call.1} parent=35 // pred_fallthru
          _
        %s316 = sand.u32 %s51, 1
        %s317 = scalar_lea.sflag [#allocation4], %s316
        %s318 = sand.u32 %s51, 1
        %s319 = smul.addr %s318, 4
        %s320 = scalar_lea.vmem [#allocation3], %s319
        %p321 = pneg %p64
        %p322 = pneg %p61
        %p323 = pneg %p85
        %p324 = pneg %p82
        %p325 = pneg %p106
        %p326 = pneg %p103
        %p327 = pneg %p127
        %p328 = pneg %p124
        %p329 = pneg %p155
        %p330 = pneg %p152
        %s331 = sand.u32 %s142, 1
        %s332 = scalar_lea.sflag [#allocation5], %s331
        %s333 = sand.u32 %s142, 1
        %s334 = smul.addr %s333, 16
        %s335 = scalar_lea.vmem [#allocation11], %s334
        %p336 = pneg %p183
        %p337 = pneg %p180
        %s338 = sand.u32 %s29, 1
        %s339 = scalar_lea.sflag [#allocation13], %s338
        %s340 = sand.u32 %s170, 1
        %s341 = smul.addr %s340, 16
        %s342 = scalar_lea.vmem [#allocation12], %s341
        %p343 = pneg %p211
        %p344 = pneg %p208
        %s345 = sand.u32 %s29, 1
        %s346 = scalar_lea.sflag [#allocation13], %s345
        %s347 = sand.u32 %s198, 1
        %s348 = smul.addr %s347, 16
        %s349 = scalar_lea.vmem [#allocation14], %s348
        %v351 = vld [vmem:[%s299] sm:$0xf]
        %v352 = vld [vmem:[#allocation6] sm:$0xf]
        %v353 = vld [vmem:[#allocation6 + $0x4] sm:$0xf]
        %v354 = vld [vmem:[#allocation6 + $0x8] sm:$0xf]
        %v355 = vld [vmem:[#allocation6 + $0xc] sm:$0xf]
        %v360 = vunpack.c.l.b16 %v352
        %v361 = vunpack.c.l.b16 %v353
        %v362 = vunpack.c.l.b16 %v354
        %v363 = vunpack.c.l.b16 %v355
        %v364 = vpack.c.b16 %v361, %v360
        %v365 = vpack.c.b16 %v363, %v362
        %vm368 = vcmask 261120
        %v370 = vsel %vm368, %v351, 0
        %372 = vmatprep.subr.bf16.mxu0 0
        %373 = vmatpush1.bf16.msra.mxu0 0
        %374 = vmatprep.subr.bf16.mxu0 0
        %375 = vmatpush1.bf16.msra.mxu0 0
        %376 = vmatprep.subr.bf16.mxu0 0
        %377 = vmatpush1.bf16.msra.mxu0 0
        %378 = vmatprep.subr.bf16.mxu0 0
        %379 = vmatpush1.bf16.msra.mxu0 0
        %380 = vmatprep.subr.bf16.mxu0 0
        %381 = vmatpush1.bf16.msra.mxu0 0
        %382 = vmatprep.subr.bf16.mxu0 0
        %383 = vmatpush1.bf16.msra.mxu0 0
        %384 = vmatprep.subr.bf16.mxu0 0
        %385 = vmatpush1.bf16.msra.mxu0 %v365
        %386 = vmatprep.subr.bf16.mxu0 0
        %387 = vmatpush1.bf16.msra.mxu0 %v364
        %388 = vmatprep.subr.bf16.mxu0 0
        %389 = vmatpush2.bf16.msra.mxu0 0
        %390 = vmatprep.subr.bf16.mxu0 0
        %391 = vmatpush2.bf16.msra.mxu0 0
        %392 = vmatprep.subr.bf16.mxu0 0
        %393 = vmatpush2.bf16.msra.mxu0 0
        %394 = vmatprep.subr.bf16.mxu0 0
        %395 = vmatpush2.bf16.msra.mxu0 0
        %396 = vmatprep.subr.bf16.mxu0 0
        %397 = vmatpush2.bf16.msra.mxu0 0
        %398 = vmatprep.subr.bf16.mxu0 0
        %399 = vmatpush2.bf16.msra.mxu0 0
        %400 = vmatprep.subr.bf16.mxu0 0
        %401 = vmatpush2.bf16.msra.mxu0 0
        %402 = vmatprep.subr.bf16.mxu0 0
        %403 = vmatpush2.bf16.msra.mxu0 0
        %404 = vmatprep.mubr.bf16.mxu0 0
        %405 = vmatmul.mubr.bf16.gmra.mxu0 %v370
        %v406 = vpop.f32.mrf.mxu0
        %v407 = vadd.f32 0.0, %v406
        %v408 = vpop.f32.mrf.mxu0
        %v409 = vpop.f32.mrf.mxu0
        %v410 = vpop.f32.mrf.mxu0
        %411 = vdwg.mxu0
        %v412 = vpack.c.bf16 %v407, %v407
        %vm413 = vcmask 257024
        %414 = vst.msk [vmem:[#allocation2] sm:$0xf] %vm413, %v412
        %v415 = vld [vmem:[#allocation2] sm:$0xf]
        %vm416 = vcmask 60416
        %417 = vst.msk [vmem:[%s335] sm:$0xf] %vm416, %v415
        %v418 = vld [vmem:[#allocation2] sm:$0xf]
        %420 = vrot.lane.b32.xlu0 %v418, 120
        %v421 = vpop.permute.xlu0 %420
        %s423 = scalar_lea.vmem %s335, 4 [#allocation11]
        %424 = vst.msk [vmem:[%s423] sm:$0xf] %vm416, %v421
        %v425 = vld [vmem:[#allocation2] sm:$0xf]
        %427 = vrot.lane.b32.xlu0 %v425, 112
        %v428 = vpop.permute.xlu0 %427
        %s430 = scalar_lea.vmem %s335, 8 [#allocation11]
        %431 = vst.msk [vmem:[%s430] sm:$0xf] %vm416, %v428
        %v432 = vld [vmem:[#allocation2] sm:$0xf]
        %434 = vrot.lane.b32.xlu0 %v432, 104
        %v435 = vpop.permute.xlu0 %434
        %s437 = scalar_lea.vmem %s335, 12 [#allocation11]
        %438 = vst.msk [vmem:[%s437] sm:$0xf] %vm416, %v435
        %v439 = vld [vmem:[#allocation8] sm:$0xf]
        %v440 = vld [vmem:[#allocation8 + $0x4] sm:$0xf]
        %v441 = vld [vmem:[#allocation8 + $0x8] sm:$0xf]
        %v442 = vld [vmem:[#allocation8 + $0xc] sm:$0xf]
        %v447 = vunpack.c.l.b16 %v439
        %v448 = vunpack.c.l.b16 %v440
        %v449 = vunpack.c.l.b16 %v441
        %v450 = vunpack.c.l.b16 %v442
        %v451 = vpack.c.b16 %v448, %v447
        %v452 = vpack.c.b16 %v450, %v449
        %455 = vmatprep.subr.bf16.mxu0 0
        %456 = vmatpush1.bf16.msra.mxu0 0
        %457 = vmatprep.subr.bf16.mxu0 0
        %458 = vmatpush1.bf16.msra.mxu0 0
        %459 = vmatprep.subr.bf16.mxu0 0
        %460 = vmatpush1.bf16.msra.mxu0 0
        %461 = vmatprep.subr.bf16.mxu0 0
        %462 = vmatpush1.bf16.msra.mxu0 0
        %463 = vmatprep.subr.bf16.mxu0 0
        %464 = vmatpush1.bf16.msra.mxu0 0
        %465 = vmatprep.subr.bf16.mxu0 0
        %466 = vmatpush1.bf16.msra.mxu0 0
        %467 = vmatprep.subr.bf16.mxu0 0
        %468 = vmatpush1.bf16.msra.mxu0 %v452
        %469 = vmatprep.subr.bf16.mxu0 0
        %470 = vmatpush1.bf16.msra.mxu0 %v451
        %471 = vmatprep.subr.bf16.mxu0 0
        %472 = vmatpush2.bf16.msra.mxu0 0
        %473 = vmatprep.subr.bf16.mxu0 0
        %474 = vmatpush2.bf16.msra.mxu0 0
        %475 = vmatprep.subr.bf16.mxu0 0
        %476 = vmatpush2.bf16.msra.mxu0 0
        %477 = vmatprep.subr.bf16.mxu0 0
        %478 = vmatpush2.bf16.msra.mxu0 0
        %479 = vmatprep.subr.bf16.mxu0 0
        %480 = vmatpush2.bf16.msra.mxu0 0
        %481 = vmatprep.subr.bf16.mxu0 0
        %482 = vmatpush2.bf16.msra.mxu0 0
        %483 = vmatprep.subr.bf16.mxu0 0
        %484 = vmatpush2.bf16.msra.mxu0 0
        %485 = vmatprep.subr.bf16.mxu0 0
        %486 = vmatpush2.bf16.msra.mxu0 0
        %487 = vmatprep.mubr.bf16.mxu0 0
        %488 = vmatmul.mubr.bf16.gmra.mxu0 %v370
        %v489 = vpop.f32.mrf.mxu0
        %v490 = vadd.f32 0.0, %v489
        %v491 = vpop.f32.mrf.mxu0
        %v492 = vpop.f32.mrf.mxu0
        %v493 = vpop.f32.mrf.mxu0
        %494 = vdwg.mxu0
        %v495 = vpack.c.bf16 %v490, %v490
        %496 = vst.msk [vmem:[#allocation2] sm:$0xf] %vm413, %v495
        %v497 = vld [vmem:[#allocation2] sm:$0xf]
        %498 = vst.msk [vmem:[%s342] sm:$0xf] %vm416, %v497
        %v499 = vld [vmem:[#allocation2] sm:$0xf]
        %501 = vrot.lane.b32.xlu0 %v499, 120
        %v502 = vpop.permute.xlu0 %501
        %s504 = scalar_lea.vmem %s342, 4 [#allocation12]
        %505 = vst.msk [vmem:[%s504] sm:$0xf] %vm416, %v502
        %v506 = vld [vmem:[#allocation2] sm:$0xf]
        %508 = vrot.lane.b32.xlu0 %v506, 112
        %v509 = vpop.permute.xlu0 %508
        %s511 = scalar_lea.vmem %s342, 8 [#allocation12]
        %512 = vst.msk [vmem:[%s511] sm:$0xf] %vm416, %v509
        %v513 = vld [vmem:[#allocation2] sm:$0xf]
        %515 = vrot.lane.b32.xlu0 %v513, 104
        %v516 = vpop.permute.xlu0 %515
        %s518 = scalar_lea.vmem %s342, 12 [#allocation12]
        %519 = vst.msk [vmem:[%s518] sm:$0xf] %vm416, %v516
        %v520 = vld [vmem:[#allocation9] sm:$0xf]
        %v521 = vld [vmem:[#allocation9 + $0x4] sm:$0xf]
        %v522 = vld [vmem:[#allocation9 + $0x8] sm:$0xf]
        %v523 = vld [vmem:[#allocation9 + $0xc] sm:$0xf]
        %v528 = vunpack.c.l.b16 %v520
        %v529 = vunpack.c.l.b16 %v521
        %v530 = vunpack.c.l.b16 %v522
        %v531 = vunpack.c.l.b16 %v523
        %v532 = vpack.c.b16 %v529, %v528
        %v533 = vpack.c.b16 %v531, %v530
        %536 = vmatprep.subr.bf16.mxu0 0
        %537 = vmatpush1.bf16.msra.mxu0 0
        %538 = vmatprep.subr.bf16.mxu0 0
        %539 = vmatpush1.bf16.msra.mxu0 0
        %540 = vmatprep.subr.bf16.mxu0 0
        %541 = vmatpush1.bf16.msra.mxu0 0
        %542 = vmatprep.subr.bf16.mxu0 0
        %543 = vmatpush1.bf16.msra.mxu0 0
        %544 = vmatprep.subr.bf16.mxu0 0
        %545 = vmatpush1.bf16.msra.mxu0 0
        %546 = vmatprep.subr.bf16.mxu0 0
        %547 = vmatpush1.bf16.msra.mxu0 0
        %548 = vmatprep.subr.bf16.mxu0 0
        %549 = vmatpush1.bf16.msra.mxu0 %v533
        %550 = vmatprep.subr.bf16.mxu0 0
        %551 = vmatpush1.bf16.msra.mxu0 %v532
        %552 = vmatprep.subr.bf16.mxu0 0
        %553 = vmatpush2.bf16.msra.mxu0 0
        %554 = vmatprep.subr.bf16.mxu0 0
        %555 = vmatpush2.bf16.msra.mxu0 0
        %556 = vmatprep.subr.bf16.mxu0 0
        %557 = vmatpush2.bf16.msra.mxu0 0
        %558 = vmatprep.subr.bf16.mxu0 0
        %559 = vmatpush2.bf16.msra.mxu0 0
        %560 = vmatprep.subr.bf16.mxu0 0
        %561 = vmatpush2.bf16.msra.mxu0 0
        %562 = vmatprep.subr.bf16.mxu0 0
        %563 = vmatpush2.bf16.msra.mxu0 0
        %564 = vmatprep.subr.bf16.mxu0 0
        %565 = vmatpush2.bf16.msra.mxu0 0
        %566 = vmatprep.subr.bf16.mxu0 0
        %567 = vmatpush2.bf16.msra.mxu0 0
        %568 = vmatprep.mubr.bf16.mxu0 0
        %569 = vmatmul.mubr.bf16.gmra.mxu0 %v370
        %v570 = vpop.f32.mrf.mxu0
        %v571 = vadd.f32 0.0, %v570
        %v572 = vpop.f32.mrf.mxu0
        %v573 = vpop.f32.mrf.mxu0
        %v574 = vpop.f32.mrf.mxu0
        %575 = vdwg.mxu0
        %v576 = vpack.c.bf16 %v571, %v571
        %577 = vst.msk [vmem:[#allocation2] sm:$0xf] %vm413, %v576
        %v578 = vld [vmem:[#allocation2] sm:$0xf]
        %579 = vst.msk [vmem:[%s349] sm:$0xf] %vm416, %v578
        %v580 = vld [vmem:[#allocation2] sm:$0xf]
        %582 = vrot.lane.b32.xlu0 %v580, 120
        %v583 = vpop.permute.xlu0 %582
        %s585 = scalar_lea.vmem %s349, 4 [#allocation14]
        %586 = vst.msk [vmem:[%s585] sm:$0xf] %vm416, %v583
        %v587 = vld [vmem:[#allocation2] sm:$0xf]
        %589 = vrot.lane.b32.xlu0 %v587, 112
        %v590 = vpop.permute.xlu0 %589
        %s592 = scalar_lea.vmem %s349, 8 [#allocation14]
        %593 = vst.msk [vmem:[%s592] sm:$0xf] %vm416, %v590
        %v594 = vld [vmem:[#allocation2] sm:$0xf]
        %596 = vrot.lane.b32.xlu0 %v594, 104
        %v597 = vpop.permute.xlu0 %596
        %s599 = scalar_lea.vmem %s349, 12 [#allocation14]
        %600 = vst.msk [vmem:[%s599] sm:$0xf] %vm416, %v597
        %s601 = sand.u32 %s142, 1
        %s602 = scalar_lea.sflag [#allocation5], %s601
        %s603 = sand.u32 %s142, 1
        %s604 = smul.addr %s603, 16
        %s605 = scalar_lea.vmem [#allocation11], %s604
        %s606 = sand.u32 %s29, 1
        %s607 = scalar_lea.sflag [#allocation13], %s606
        %s608 = sand.u32 %s170, 1
        %s609 = smul.addr %s608, 16
        %s610 = scalar_lea.vmem [#allocation12], %s609
        %s611 = sand.u32 %s29, 1
        %s612 = scalar_lea.sflag [#allocation13], %s611
        %s613 = sand.u32 %s198, 1
        %s614 = smul.addr %s613, 16
        %s615 = scalar_lea.vmem [#allocation14], %s614
        // Predicated region
        $region53: #{tpu_custom_call.1} parent=35 // pred_check
          %p616 = pneg %p152
        $region54: #{tpu_custom_call.1} parent=35 // pred_check_branch
          %618 = sbr.rel (%p616) target = $region56
        $region55: #{tpu_custom_call.1} parent=35 // pred_region
          %s620 = ssub.s32 256, 256
          %621 = vsyncadd %s602, %s620
          %s622 = smul.addr %s33, 4
          %s623 = sadd.s32 %s34, %s622
          %s624 = smul.addr %s623, 64
          %s625 = scalar_lea.hbm %s4, %s624
          %s626 = sshll.u32 %s605, 4
          %s627 = int_to_ptr.vmem [resolvable:$true] %s626
          %632 = dma.vmem_to_hbm [thread:$0]  %s627, 256, %s625, %s602, 64, 64, 4
        $region56: #{tpu_custom_call.1} parent=35 // pred_fallthru
          _
        // Predicated region
        $region57: #{tpu_custom_call.1} parent=35 // pred_check
          %p633 = pneg %p180
        $region58: #{tpu_custom_call.1} parent=35 // pred_check_branch
          %635 = sbr.rel (%p633) target = $region60
        $region59: #{tpu_custom_call.1} parent=35 // pred_region
          %s637 = ssub.s32 256, 256
          %638 = vsyncadd %s607, %s637
          %s639 = smul.addr %s33, 4
          %s640 = sadd.s32 %s34, %s639
          %s641 = smul.addr %s640, 64
          %s642 = scalar_lea.hbm %s5, %s641
          %s643 = sshll.u32 %s610, 4
          %s644 = int_to_ptr.vmem [resolvable:$true] %s643
          %649 = dma.vmem_to_hbm [thread:$0]  %s644, 256, %s642, %s607, 64, 64, 4
        $region60: #{tpu_custom_call.1} parent=35 // pred_fallthru
          _
        // Predicated region
        $region61: #{tpu_custom_call.1} parent=35 // pred_check
          %p650 = pneg %p208
        $region62: #{tpu_custom_call.1} parent=35 // pred_check_branch
          %652 = sbr.rel (%p650) target = $region64
        $region63: #{tpu_custom_call.1} parent=35 // pred_region
          %s654 = ssub.s32 256, 256
          %655 = vsyncadd %s612, %s654
          %s656 = smul.addr %s33, 4
          %s657 = sadd.s32 %s34, %s656
          %s658 = smul.addr %s657, 64
          %s659 = scalar_lea.hbm %s6, %s658
          %s660 = sshll.u32 %s615, 4
          %s661 = int_to_ptr.vmem [resolvable:$true] %s660
          %666 = dma.vmem_to_hbm [thread:$0]  %s661, 256, %s659, %s612, 64, 64, 4
        $region64: #{tpu_custom_call.1} parent=35 // pred_fallthru
          _
      $region36: #{tpu_custom_call.1} parent=5 // pred_fallthru
        _
      %p667 = scmp.le.s32.totalorder 2, %s24
      // Predicated region
      $region65: #{tpu_custom_call.1} parent=5 // pred_check
        %p668 = pneg %p667
      $region66: #{tpu_custom_call.1} parent=5 // pred_check_branch
        %670 = sbr.rel (%p668) target = $region68
      $region67: #{tpu_custom_call.1} parent=5 // pred_region
        %s671 = ssub.s32 %s24, 2
        // Predicated region
        $region69: #{tpu_custom_call.1} parent=67 // pred_check
          %p672 = pneg %p158
        $region70: #{tpu_custom_call.1} parent=67 // pred_check_branch
          %674 = sbr.rel (%p672) target = $region72
        $region71: #{tpu_custom_call.1} parent=67 // pred_region
          %s675 = sand.u32 %s143, 1
          %s676 = scalar_lea.sflag [#allocation5], %s675
          %s677 = sand.u32 %s143, 1
          %s678 = smul.addr %s677, 16
          %s679 = scalar_lea.vmem [#allocation11], %s678
          %680 = dma.done %s676, 256
        $region72: #{tpu_custom_call.1} parent=67 // pred_fallthru
          _
        // Predicated region
        $region73: #{tpu_custom_call.1} parent=67 // pred_check
          %p681 = pneg %p186
        $region74: #{tpu_custom_call.1} parent=67 // pred_check_branch
          %683 = sbr.rel (%p681) target = $region76
        $region75: #{tpu_custom_call.1} parent=67 // pred_region
          %s684 = sand.u32 %s30, 1
          %s685 = scalar_lea.sflag [#allocation13], %s684
          %s686 = sand.u32 %s171, 1
          %s687 = smul.addr %s686, 16
          %s688 = scalar_lea.vmem [#allocation12], %s687
          %689 = dma.done %s685, 256
        $region76: #{tpu_custom_call.1} parent=67 // pred_fallthru
          _
        // Predicated region
        $region77: #{tpu_custom_call.1} parent=67 // pred_check
          %p690 = pneg %p214
        $region78: #{tpu_custom_call.1} parent=67 // pred_check_branch
          %692 = sbr.rel (%p690) target = $region80
        $region79: #{tpu_custom_call.1} parent=67 // pred_region
          %s693 = sand.u32 %s30, 1
          %s694 = scalar_lea.sflag [#allocation13], %s693
          %s695 = sand.u32 %s199, 1
          %s696 = smul.addr %s695, 16
          %s697 = scalar_lea.vmem [#allocation14], %s696
          %698 = dma.done %s694, 256
        $region80: #{tpu_custom_call.1} parent=67 // pred_fallthru
          _
      $region68: #{tpu_custom_call.1} parent=5 // pred_fallthru
        _
    $region6: #{tpu_custom_call.1} parent=1 // loop_footer
      %s28 = sadd.s32 1, %s24
    $region7: #{tpu_custom_call.1} parent=1 // loop_footer_branch
      %23 = sbr.rel target = $region3
    $region8: #{tpu_custom_call.1} parent=1 // loop_exit
      _
    %699 = vsyncpa [#allocation4], 1
    %s700 = scalar_lea.sflag [#allocation4], 1
    %701 = vsyncpa %s700, 1
    %702 = vsyncpa [#allocation7], 1
    %703 = vsyncpa [#allocation10], 1
    %704 = vsyncpa [#allocation5], 1
    %s705 = scalar_lea.sflag [#allocation5], 1
    %706 = vsyncpa %s705, 1
    %707 = vsyncpa [#allocation13], 1
    %s708 = scalar_lea.sflag [#allocation13], 1
    %709 = vsyncpa %s708, 1

// kernel: tpu_custom_call.1
$region0: #{tpu_custom_call.1}
  #allocation0 [shape = 'u32[]', space=smem, size = 0x4, offset = 0x4, fixed_abs, tag = 'smem constant byte address 0x4 - core index']
  #allocation1 [shape = 'u32[144,128]{1,0:T(1,128)}', space=vmem, size = 0x12000, scoped, tag = 'internal scratch']
  #allocation2 [shape = 'bf16[8,32]{1,0:T(8,128)(2,1)}', space=vmem, size = 0x800, scoped, tag = 'scratch operand']
  %s0 = inlined_call_operand.hbm [shape: bf16[2,8,32], index: 0, kind: input, shape index: {}]
  %s1 = inlined_call_operand.hbm [shape: bf16[32,32], index: 1, kind: input, shape index: {}]
  %s2 = inlined_call_operand.hbm [shape: bf16[32,32], index: 2, kind: input, shape index: {}]
  %s3 = inlined_call_operand.hbm [shape: bf16[32,32], index: 3, kind: input, shape index: {}]
  %s4 = inlined_call_operand.hbm [shape: bf16[2,4,8,8], index: 4, kind: output, shape index: {0}]
  %s5 = inlined_call_operand.hbm [shape: bf16[2,4,8,8], index: 5, kind: output, shape index: {1}]
  %s6 = inlined_call_operand.hbm [shape: bf16[2,4,8,8], index: 6, kind: output, shape index: {2}]
  %7 = xla_tuple %s4, %s5, %s6
  %s8 = sld [smem:[#allocation0]]
  $region81: #{tpu_custom_call.1} parent=0
    _
  %s10 = ssub.s32 1, %s8
  %s11 = scalar_select 0, %s10, %s8
  $region1: #{tpu_custom_call.1} parent=0
    #allocation3 [shape = 'u8[4096]{0}', space=vmem, size = 0x1000, scoped, tag = 'input window, operand 0']
    #allocation4 [shape = 's32[2]{0}', space=sflag, size = 0x8, scoped, tag = 'scoped memory for tpu_custom_call.1']
    #allocation5 [shape = 's32[2]{0}', space=sflag, size = 0x8, scoped, tag = 'scoped memory for tpu_custom_call.1']
    #allocation6 [shape = 'u8[8192]{0}', space=vmem, size = 0x2000, scoped, tag = 'input window, operand 1, single buffered']
    #allocation7 [shape = 's32[1]{0}', space=sflag, size = 0x4, scoped, tag = 'scoped memory for tpu_custom_call.1']
    #allocation8 [shape = 'u8[8192]{0}', space=vmem, size = 0x2000, scoped, tag = 'input window, operand 2, single buffered']
    #allocation9 [shape = 'u8[8192]{0}', space=vmem, size = 0x2000, scoped, tag = 'input window, operand 3, single buffered']
    #allocation10 [shape = 's32[1]{0}', space=sflag, size = 0x4, scoped, tag = 'scoped memory for tpu_custom_call.1']
    #allocation11 [shape = 'u8[16384]{0}', space=vmem, size = 0x4000, scoped, tag = 'output window, operand 0']
    #allocation12 [shape = 'u8[16384]{0}', space=vmem, size = 0x4000, scoped, tag = 'output window, operand 1']
    #allocation13 [shape = 's32[2]{0}', space=sflag, size = 0x8, scoped, tag = 'scoped memory for tpu_custom_call.1']
    #allocation14 [shape = 'u8[16384]{0}', space=vmem, size = 0x4000, scoped, tag = 'output window, operand 2']
    %12 = vsyncpa [#allocation4], 0
    %s13 = scalar_lea.sflag [#allocation4], 1
    %14 = vsyncpa %s13, 0
    %15 = vsyncpa [#allocation7], 0
    %16 = vsyncpa [#allocation10], 0
    %17 = vsyncpa [#allocation5], 0
    %s18 = scalar_lea.sflag [#allocation5], 1
    %19 = vsyncpa %s18, 0
    %20 = vsyncpa [#allocation13], 0
    %s21 = scalar_lea.sflag [#allocation13], 1
    %22 = vsyncpa %s21, 0
    loop: start=0, step=1, limit=4
    $region2: #{tpu_custom_call.1} parent=1 // loop_pre_header
      _
    $region3: #{tpu_custom_call.1} parent=1 // loop_header
      %s24 = sphi 0, %s28
      %p25 = scmp.ge.s32.totalorder %s24, 4
      %s31 = sphi 0, %s43
      %s32 = sphi 0, %s39
      %s33 = sphi 0, %s31
      %s34 = sphi 0, %s32
      %s35 = sphi 0, %s33
      %s36 = sphi 0, %s34
      %s48 = sphi 0, %s50
      %s51 = sphi 0, %s48
      %s52 = sphi 0, %s51
      %s68 = sphi 0, %s52
      %s72 = sphi 0, %s72
      %s74 = sphi 0, %s72
      %s75 = sphi 0, %s74
      %s89 = sphi 0, %s75
      %s93 = sphi 0, %s93
      %s95 = sphi 0, %s93
      %s96 = sphi 0, %s95
      %s110 = sphi 0, %s96
      %s114 = sphi 0, %s114
      %s116 = sphi 0, %s114
      %s117 = sphi 0, %s116
      %s131 = sphi 0, %s117
      %s139 = sphi 0, %s141
      %s142 = sphi 0, %s139
      %s143 = sphi 0, %s142
      %s159 = sphi 0, %s143
      %s167 = sphi 0, %s169
      %s170 = sphi 0, %s167
      %s171 = sphi 0, %s170
      %s187 = sphi 0, %s171
      %s195 = sphi 0, %s197
      %s198 = sphi 0, %s195
      %s199 = sphi 0, %s198
      %s215 = sphi 0, %s199
    $region4: #{tpu_custom_call.1} parent=1 // loop_header_branch
      %27 = sbr.rel (%p25) target = $region8
    $region5: #{tpu_custom_call.1} parent=1 // loop_body
      %s29 = ssub.s32 %s24, 1
      %s30 = ssub.s32 %s24, 2
      %s37 = sadd.s32 1, %s32
      %p38 = scmp.ge.s32.totalorder %s37, 1
      %s39 = scalar_select %p38, 0, %s37
      %s40 = sadd.s32 1, %s31
      %s41 = scalar_select %p38, %s40, %s31
      %p42 = scmp.ge.s32.totalorder %s41, 2
      %s43 = scalar_select %p42, 0, %s41
      %s44 = ssub.s32 %s31, %s43
      %s45 = ssub.s32 %s32, %s39
      %s46 = sor.u32 %s44, %s45
      %p47 = scmp.eq.s32.totalorder %s46, 0
      %s49 = sadd.s32 %s48, 1
      %s50 = scalar_select %p47, %s48, %s49
      %p53 = pneg %p47
      %p54 = scmp.eq.s32.totalorder %s24, 1
      %p55 = por %p53, %p54
      %p56 = scmp.ne.s32.totalorder %s48, %s51
      %p57 = scmp.eq.s32.totalorder %s24, 0
      %p58 = por %p56, %p57
      %p59 = scmp.ne.s32.totalorder %s48, %s51
      %p60 = scmp.eq.s32.totalorder %s29, 1
      %p61 = por %p59, %p60
      %p62 = scmp.ne.s32.totalorder %s51, %s52
      %p63 = scmp.eq.s32.totalorder %s29, 0
      %p64 = por %p62, %p63
      %p65 = scmp.ne.s32.totalorder %s51, %s52
      %p66 = scmp.eq.s32.totalorder %s30, 1
      %p67 = por %p65, %p66
      %p69 = scmp.ne.s32.totalorder %s52, %s68
      %p70 = scmp.eq.s32.totalorder %s30, 0
      %p71 = por %p69, %p70
      %s73 = sadd.s32 %s72, 1
      %p76 = scmp.eq.s32.totalorder %s24, 1
      %p77 = scmp.ne.s32.totalorder %s72, %s74
      %p78 = scmp.eq.s32.totalorder %s24, 0
      %p79 = por %p77, %p78
      %p80 = scmp.ne.s32.totalorder %s72, %s74
      %p81 = scmp.eq.s32.totalorder %s29, 1
      %p82 = por %p80, %p81
      %p83 = scmp.ne.s32.totalorder %s74, %s75
      %p84 = scmp.eq.s32.totalorder %s29, 0
      %p85 = por %p83, %p84
      %p86 = scmp.ne.s32.totalorder %s74, %s75
      %p87 = scmp.eq.s32.totalorder %s30, 1
      %p88 = por %p86, %p87
      %p90 = scmp.ne.s32.totalorder %s75, %s89
      %p91 = scmp.eq.s32.totalorder %s30, 0
      %p92 = por %p90, %p91
      %s94 = sadd.s32 %s93, 1
      %p97 = scmp.eq.s32.totalorder %s24, 1
      %p98 = scmp.ne.s32.totalorder %s93, %s95
      %p99 = scmp.eq.s32.totalorder %s24, 0
      %p100 = por %p98, %p99
      %p101 = scmp.ne.s32.totalorder %s93, %s95
      %p102 = scmp.eq.s32.totalorder %s29, 1
      %p103 = por %p101, %p102
      %p104 = scmp.ne.s32.totalorder %s95, %s96
      %p105 = scmp.eq.s32.totalorder %s29, 0
      %p106 = por %p104, %p105
      %p107 = scmp.ne.s32.totalorder %s95, %s96
      %p108 = scmp.eq.s32.totalorder %s30, 1
      %p109 = por %p107, %p108
      %p111 = scmp.ne.s32.totalorder %s96, %s110
      %p112 = scmp.eq.s32.totalorder %s30, 0
      %p113 = por %p111, %p112
      %s115 = sadd.s32 %s114, 1
      %p118 = scmp.eq.s32.totalorder %s24, 1
      %p119 = scmp.ne.s32.totalorder %s114, %s116
      %p120 = scmp.eq.s32.totalorder %s24, 0
      %p121 = por %p119, %p120
      %p122 = scmp.ne.s32.totalorder %s114, %s116
      %p123 = scmp.eq.s32.totalorder %s29, 1
      %p124 = por %p122, %p123
      %p125 = scmp.ne.s32.totalorder %s116, %s117
      %p126 = scmp.eq.s32.totalorder %s29, 0
      %p127 = por %p125, %p126
      %p128 = scmp.ne.s32.totalorder %s116, %s117
      %p129 = scmp.eq.s32.totalorder %s30, 1
      %p130 = por %p128, %p129
      %p132 = scmp.ne.s32.totalorder %s117, %s131
      %p133 = scmp.eq.s32.totalorder %s30, 0
      %p134 = por %p132, %p133
      %s135 = ssub.s32 %s31, %s43
      %s136 = ssub.s32 %s32, %s39
      %s137 = sor.u32 %s135, %s136
      %p138 = scmp.eq.s32.totalorder %s137, 0
      %s140 = sadd.s32 %s139, 1
      %s141 = scalar_select %p138, %s139, %s140
      %p144 = pneg %p138
      %p145 = scmp.eq.s32.totalorder %s24, 1
      %p146 = por %p144, %p145
      %p147 = scmp.ne.s32.totalorder %s139, %s142
      %p148 = scmp.eq.s32.totalorder %s24, 0
      %p149 = por %p147, %p148
      %p150 = scmp.ne.s32.totalorder %s139, %s142
      %p151 = scmp.eq.s32.totalorder %s29, 1
      %p152 = por %p150, %p151
      %p153 = scmp.ne.s32.totalorder %s142, %s143
      %p154 = scmp.eq.s32.totalorder %s29, 0
      %p155 = por %p153, %p154
      %p156 = scmp.ne.s32.totalorder %s142, %s143
      %p157 = scmp.eq.s32.totalorder %s30, 1
      %p158 = por %p156, %p157
      %p160 = scmp.ne.s32.totalorder %s143, %s159
      %p161 = scmp.eq.s32.totalorder %s30, 0
      %p162 = por %p160, %p161
      %s163 = ssub.s32 %s31, %s43
      %s164 = ssub.s32 %s32, %s39
      %s165 = sor.u32 %s163, %s164
      %p166 = scmp.eq.s32.totalorder %s165, 0
      %s168 = sadd.s32 %s167, 1
      %s169 = scalar_select %p166, %s167, %s168
      %p172 = pneg %p166
      %p173 = scmp.eq.s32.totalorder %s24, 1
      %p174 = por %p172, %p173
      %p175 = scmp.ne.s32.totalorder %s167, %s170
      %p176 = scmp.eq.s32.totalorder %s24, 0
      %p177 = por %p175, %p176
      %p178 = scmp.ne.s32.totalorder %s167, %s170
      %p179 = scmp.eq.s32.totalorder %s29, 1
      %p180 = por %p178, %p179
      %p181 = scmp.ne.s32.totalorder %s170, %s171
      %p182 = scmp.eq.s32.totalorder %s29, 0
      %p183 = por %p181, %p182
      %p184 = scmp.ne.s32.totalorder %s170, %s171
      %p185 = scmp.eq.s32.totalorder %s30, 1
      %p186 = por %p184, %p185
      %p188 = scmp.ne.s32.totalorder %s171, %s187
      %p189 = scmp.eq.s32.totalorder %s30, 0
      %p190 = por %p188, %p189
      %s191 = ssub.s32 %s31, %s43
      %s192 = ssub.s32 %s32, %s39
      %s193 = sor.u32 %s191, %s192
      %p194 = scmp.eq.s32.totalorder %s193, 0
      %s196 = sadd.s32 %s195, 1
      %s197 = scalar_select %p194, %s195, %s196
      %p200 = pneg %p194
      %p201 = scmp.eq.s32.totalorder %s24, 1
      %p202 = por %p200, %p201
      %p203 = scmp.ne.s32.totalorder %s195, %s198
      %p204 = scmp.eq.s32.totalorder %s24, 0
      %p205 = por %p203, %p204
      %p206 = scmp.ne.s32.totalorder %s195, %s198
      %p207 = scmp.eq.s32.totalorder %s29, 1
      %p208 = por %p206, %p207
      %p209 = scmp.ne.s32.totalorder %s198, %s199
      %p210 = scmp.eq.s32.totalorder %s29, 0
      %p211 = por %p209, %p210
      %p212 = scmp.ne.s32.totalorder %s198, %s199
      %p213 = scmp.eq.s32.totalorder %s30, 1
      %p214 = por %p212, %p213
      %p216 = scmp.ne.s32.totalorder %s199, %s215
      %p217 = scmp.eq.s32.totalorder %s30, 0
      %p218 = por %p216, %p217
      %p219 = scmp.le.s32.totalorder 1, %s24
      %p220 = scmp.lt.s32.totalorder %s24, 3
      %p221 = pnand %p219, %p220
      %p222 = pneg %p221
      // Predicated region
      $region9: #{tpu_custom_call.1} parent=5 // pred_check
        _
      $region10: #{tpu_custom_call.1} parent=5 // pred_check_branch
        %224 = sbr.rel (%p221) target = $region12
      $region11: #{tpu_custom_call.1} parent=5 // pred_region
        %s225 = ssub.s32 %s24, 1
        // Predicated region
        $region13: #{tpu_custom_call.1} parent=11 // pred_check
          %p226 = pneg %p85
        $region14: #{tpu_custom_call.1} parent=11 // pred_check_branch
          %228 = sbr.rel (%p226) target = $region16
        $region15: #{tpu_custom_call.1} parent=11 // pred_region
          %s230 = ssub.s32 256, 256
          %231 = vsyncadd [#allocation7], %s230
          %s232 = sshll.u32 [#allocation6], 4
          %s233 = int_to_ptr.vmem [resolvable:$true] %s232
          %238 = dma.hbm_to_vmem [thread:$0]  %s1, 256, %s233, [#allocation7], 64, 64, 4
        $region16: #{tpu_custom_call.1} parent=11 // pred_fallthru
          _
        // Predicated region
        $region17: #{tpu_custom_call.1} parent=11 // pred_check
          %p239 = pneg %p106
        $region18: #{tpu_custom_call.1} parent=11 // pred_check_branch
          %241 = sbr.rel (%p239) target = $region20
        $region19: #{tpu_custom_call.1} parent=11 // pred_region
          %s243 = ssub.s32 256, 256
          %244 = vsyncadd [#allocation7], %s243
          %s245 = sshll.u32 [#allocation8], 4
          %s246 = int_to_ptr.vmem [resolvable:$true] %s245
          %251 = dma.hbm_to_vmem [thread:$0]  %s2, 256, %s246, [#allocation7], 64, 64, 4
        $region20: #{tpu_custom_call.1} parent=11 // pred_fallthru
          _
        // Predicated region
        $region21: #{tpu_custom_call.1} parent=11 // pred_check
          %p252 = pneg %p127
        $region22: #{tpu_custom_call.1} parent=11 // pred_check_branch
          %254 = sbr.rel (%p252) target = $region24
        $region23: #{tpu_custom_call.1} parent=11 // pred_region
          %s256 = ssub.s32 256, 256
          %257 = vsyncadd [#allocation10], %s256
          %s258 = sshll.u32 [#allocation9], 4
          %s259 = int_to_ptr.vmem [resolvable:$true] %s258
          %264 = dma.hbm_to_vmem [thread:$0]  %s3, 256, %s259, [#allocation10], 64, 64, 4
        $region24: #{tpu_custom_call.1} parent=11 // pred_fallthru
          _
      $region12: #{tpu_custom_call.1} parent=5 // pred_fallthru
        _
      %p265 = scmp.lt.s32.totalorder %s24, 2
      // Predicated region
      $region25: #{tpu_custom_call.1} parent=5 // pred_check
        %p266 = pneg %p265
      $region26: #{tpu_custom_call.1} parent=5 // pred_check_branch
        %268 = sbr.rel (%p266) target = $region28
      $region27: #{tpu_custom_call.1} parent=5 // pred_region
        // Predicated region
        $region29: #{tpu_custom_call.1} parent=27 // pred_check
          %p269 = pneg %p58
        $region30: #{tpu_custom_call.1} parent=27 // pred_check_branch
          %271 = sbr.rel (%p269) target = $region32
        $region31: #{tpu_custom_call.1} parent=27 // pred_region
          %s272 = sand.u32 %s48, 1
          %s273 = scalar_lea.sflag [#allocation4], %s272
          %s274 = sand.u32 %s48, 1
          %s275 = smul.addr %s274, 4
          %s276 = scalar_lea.vmem [#allocation3], %s275
          %s278 = ssub.s32 64, 64
          %279 = vsyncadd %s273, %s278
          %s280 = sadd.s32 %s32, %s31
          %s281 = smul.addr %s280, 64
          %s282 = scalar_lea.hbm %s0, %s281
          %s284 = sshll.u32 %s276, 4
          %s285 = int_to_ptr.vmem [resolvable:$true] %s284
          %287 = dma.hbm_to_vmem [thread:$0]  %s282, 64, %s285, %s273
        $region32: #{tpu_custom_call.1} parent=27 // pred_fallthru
          _
      $region28: #{tpu_custom_call.1} parent=5 // pred_fallthru
        _
      %p288 = scmp.le.s32.totalorder 1, %s24
      %p289 = scmp.lt.s32.totalorder %s24, 3
      %p290 = pnand %p288, %p289
      %p291 = pneg %p290
      // Predicated region
      $region33: #{tpu_custom_call.1} parent=5 // pred_check
        _
      $region34: #{tpu_custom_call.1} parent=5 // pred_check_branch
        %293 = sbr.rel (%p290) target = $region36
      $region35: #{tpu_custom_call.1} parent=5 // pred_region
        %s294 = ssub.s32 %s24, 1
        %s295 = sand.u32 %s51, 1
        %s296 = scalar_lea.sflag [#allocation4], %s295
        %s297 = sand.u32 %s51, 1
        %s298 = smul.addr %s297, 4
        %s299 = scalar_lea.vmem [#allocation3], %s298
        // Predicated region
        $region37: #{tpu_custom_call.1} parent=35 // pred_check
          %p300 = pneg %p64
        $region38: #{tpu_custom_call.1} parent=35 // pred_check_branch
          %302 = sbr.rel (%p300) target = $region40
        $region39: #{tpu_custom_call.1} parent=35 // pred_region
          %303 = dma.done %s296, 64
        $region40: #{tpu_custom_call.1} parent=35 // pred_fallthru
          _
        // Predicated region
        $region41: #{tpu_custom_call.1} parent=35 // pred_check
          %p304 = pneg %p85
        $region42: #{tpu_custom_call.1} parent=35 // pred_check_branch
          %306 = sbr.rel (%p304) target = $region44
        $region43: #{tpu_custom_call.1} parent=35 // pred_region
          %307 = dma.done [#allocation7], 256
        $region44: #{tpu_custom_call.1} parent=35 // pred_fallthru
          _
        // Predicated region
        $region45: #{tpu_custom_call.1} parent=35 // pred_check
          %p308 = pneg %p106
        $region46: #{tpu_custom_call.1} parent=35 // pred_check_branch
          %310 = sbr.rel (%p308) target = $region48
        $region47: #{tpu_custom_call.1} parent=35 // pred_region
          %311 = dma.done [#allocation7], 256
        $region48: #{tpu_custom_call.1} parent=35 // pred_fallthru
          _
        // Predicated region
        $region49: #{tpu_custom_call.1} parent=35 // pred_check
          %p312 = pneg %p127
        $region50: #{tpu_custom_call.1} parent=35 // pred_check_branch
          %314 = sbr.rel (%p312) target = $region52
        $region51: #{tpu_custom_call.1} parent=35 // pred_region
          %315 = dma.done [#allocation10], 256
        $region52: #{tpu_custom_call.1} parent=35 // pred_fallthru
          _
        %s316 = sand.u32 %s51, 1
        %s317 = scalar_lea.sflag [#allocation4], %s316
        %s318 = sand.u32 %s51, 1
        %s319 = smul.addr %s318, 4
        %s320 = scalar_lea.vmem [#allocation3], %s319
        %p321 = pneg %p64
        %p322 = pneg %p61
        %p323 = pneg %p85
        %p324 = pneg %p82
        %p325 = pneg %p106
        %p326 = pneg %p103
        %p327 = pneg %p127
        %p328 = pneg %p124
        %p329 = pneg %p155
        %p330 = pneg %p152
        %s331 = sand.u32 %s142, 1
        %s332 = scalar_lea.sflag [#allocation5], %s331
        %s333 = sand.u32 %s142, 1
        %s334 = smul.addr %s333, 16
        %s335 = scalar_lea.vmem [#allocation11], %s334
        %p336 = pneg %p183
        %p337 = pneg %p180
        %s338 = sand.u32 %s29, 1
        %s339 = scalar_lea.sflag [#allocation13], %s338
        %s340 = sand.u32 %s170, 1
        %s341 = smul.addr %s340, 16
        %s342 = scalar_lea.vmem [#allocation12], %s341
        %p343 = pneg %p211
        %p344 = pneg %p208
        %s345 = sand.u32 %s29, 1
        %s346 = scalar_lea.sflag [#allocation13], %s345
        %s347 = sand.u32 %s198, 1
        %s348 = smul.addr %s347, 16
        %s349 = scalar_lea.vmem [#allocation14], %s348
        %v351 = vld [vmem:[%s299] sm:$0xf]
        %v352 = vld [vmem:[#allocation6] sm:$0xf]
        %v353 = vld [vmem:[#allocation6 + $0x4] sm:$0xf]
        %v354 = vld [vmem:[#allocation6 + $0x8] sm:$0xf]
        %v355 = vld [vmem:[#allocation6 + $0xc] sm:$0xf]
        %v360 = vunpack.c.l.b16 %v352
        %v361 = vunpack.c.l.b16 %v353
        %v362 = vunpack.c.l.b16 %v354
        %v363 = vunpack.c.l.b16 %v355
        %v364 = vpack.c.b16 %v361, %v360
        %v365 = vpack.c.b16 %v363, %v362
        %vm368 = vcmask 261120
        %v370 = vsel %vm368, %v351, 0
        %372 = vmatprep.subr.bf16.mxu0 0
        %373 = vmatpush1.bf16.msra.mxu0 0
        %374 = vmatprep.subr.bf16.mxu0 0
        %375 = vmatpush1.bf16.msra.mxu0 0
        %376 = vmatprep.subr.bf16.mxu0 0
        %377 = vmatpush1.bf16.msra.mxu0 0
        %378 = vmatprep.subr.bf16.mxu0 0
        %379 = vmatpush1.bf16.msra.mxu0 0
        %380 = vmatprep.subr.bf16.mxu0 0
        %381 = vmatpush1.bf16.msra.mxu0 0
        %382 = vmatprep.subr.bf16.mxu0 0
        %383 = vmatpush1.bf16.msra.mxu0 0
        %384 = vmatprep.subr.bf16.mxu0 0
        %385 = vmatpush1.bf16.msra.mxu0 %v365
        %386 = vmatprep.subr.bf16.mxu0 0
        %387 = vmatpush1.bf16.msra.mxu0 %v364
        %388 = vmatprep.subr.bf16.mxu0 0
        %389 = vmatpush2.bf16.msra.mxu0 0
        %390 = vmatprep.subr.bf16.mxu0 0
        %391 = vmatpush2.bf16.msra.mxu0 0
        %392 = vmatprep.subr.bf16.mxu0 0
        %393 = vmatpush2.bf16.msra.mxu0 0
        %394 = vmatprep.subr.bf16.mxu0 0
        %395 = vmatpush2.bf16.msra.mxu0 0
        %396 = vmatprep.subr.bf16.mxu0 0
        %397 = vmatpush2.bf16.msra.mxu0 0
        %398 = vmatprep.subr.bf16.mxu0 0
        %399 = vmatpush2.bf16.msra.mxu0 0
        %400 = vmatprep.subr.bf16.mxu0 0
        %401 = vmatpush2.bf16.msra.mxu0 0
        %402 = vmatprep.subr.bf16.mxu0 0
        %403 = vmatpush2.bf16.msra.mxu0 0
        %404 = vmatprep.mubr.bf16.mxu0 0
        %405 = vmatmul.mubr.bf16.gmra.mxu0 %v370
        %v406 = vpop.f32.mrf.mxu0
        %v407 = vadd.f32 0.0, %v406
        %v408 = vpop.f32.mrf.mxu0
        %v409 = vpop.f32.mrf.mxu0
        %v410 = vpop.f32.mrf.mxu0
        %411 = vdwg.mxu0
        %v412 = vpack.c.bf16 %v407, %v407
        %vm413 = vcmask 257024
        %414 = vst.msk [vmem:[#allocation2] sm:$0xf] %vm413, %v412
        %v415 = vld [vmem:[#allocation2] sm:$0xf]
        %vm416 = vcmask 60416
        %417 = vst.msk [vmem:[%s335] sm:$0xf] %vm416, %v415
        %v418 = vld [vmem:[#allocation2] sm:$0xf]
        %420 = vrot.lane.b32.xlu0 %v418, 120
        %v421 = vpop.permute.xlu0 %420
        %s423 = scalar_lea.vmem %s335, 4 [#allocation11]
        %424 = vst.msk [vmem:[%s423] sm:$0xf] %vm416, %v421
        %v425 = vld [vmem:[#allocation2] sm:$0xf]
        %427 = vrot.lane.b32.xlu0 %v425, 112
        %v428 = vpop.permute.xlu0 %427
        %s430 = scalar_lea.vmem %s335, 8 [#allocation11]
        %431 = vst.msk [vmem:[%s430] sm:$0xf] %vm416, %v428
        %v432 = vld [vmem:[#allocation2] sm:$0xf]
        %434 = vrot.lane.b32.xlu0 %v432, 104
        %v435 = vpop.permute.xlu0 %434
        %s437 = scalar_lea.vmem %s335, 12 [#allocation11]
        %438 = vst.msk [vmem:[%s437] sm:$0xf] %vm416, %v435
        %v439 = vld [vmem:[#allocation8] sm:$0xf]
        %v440 = vld [vmem:[#allocation8 + $0x4] sm:$0xf]
        %v441 = vld [vmem:[#allocation8 + $0x8] sm:$0xf]
        %v442 = vld [vmem:[#allocation8 + $0xc] sm:$0xf]
        %v447 = vunpack.c.l.b16 %v439
        %v448 = vunpack.c.l.b16 %v440
        %v449 = vunpack.c.l.b16 %v441
        %v450 = vunpack.c.l.b16 %v442
        %v451 = vpack.c.b16 %v448, %v447
        %v452 = vpack.c.b16 %v450, %v449
        %455 = vmatprep.subr.bf16.mxu0 0
        %456 = vmatpush1.bf16.msra.mxu0 0
        %457 = vmatprep.subr.bf16.mxu0 0
        %458 = vmatpush1.bf16.msra.mxu0 0
        %459 = vmatprep.subr.bf16.mxu0 0
        %460 = vmatpush1.bf16.msra.mxu0 0
        %461 = vmatprep.subr.bf16.mxu0 0
        %462 = vmatpush1.bf16.msra.mxu0 0
        %463 = vmatprep.subr.bf16.mxu0 0
        %464 = vmatpush1.bf16.msra.mxu0 0
        %465 = vmatprep.subr.bf16.mxu0 0
        %466 = vmatpush1.bf16.msra.mxu0 0
        %467 = vmatprep.subr.bf16.mxu0 0
        %468 = vmatpush1.bf16.msra.mxu0 %v452
        %469 = vmatprep.subr.bf16.mxu0 0
        %470 = vmatpush1.bf16.msra.mxu0 %v451
        %471 = vmatprep.subr.bf16.mxu0 0
        %472 = vmatpush2.bf16.msra.mxu0 0
        %473 = vmatprep.subr.bf16.mxu0 0
        %474 = vmatpush2.bf16.msra.mxu0 0
        %475 = vmatprep.subr.bf16.mxu0 0
        %476 = vmatpush2.bf16.msra.mxu0 0
        %477 = vmatprep.subr.bf16.mxu0 0
        %478 = vmatpush2.bf16.msra.mxu0 0
        %479 = vmatprep.subr.bf16.mxu0 0
        %480 = vmatpush2.bf16.msra.mxu0 0
        %481 = vmatprep.subr.bf16.mxu0 0
        %482 = vmatpush2.bf16.msra.mxu0 0
        %483 = vmatprep.subr.bf16.mxu0 0
        %484 = vmatpush2.bf16.msra.mxu0 0
        %485 = vmatprep.subr.bf16.mxu0 0
        %486 = vmatpush2.bf16.msra.mxu0 0
        %487 = vmatprep.mubr.bf16.mxu0 0
        %488 = vmatmul.mubr.bf16.gmra.mxu0 %v370
        %v489 = vpop.f32.mrf.mxu0
        %v490 = vadd.f32 0.0, %v489
        %v491 = vpop.f32.mrf.mxu0
        %v492 = vpop.f32.mrf.mxu0
        %v493 = vpop.f32.mrf.mxu0
        %494 = vdwg.mxu0
        %v495 = vpack.c.bf16 %v490, %v490
        %496 = vst.msk [vmem:[#allocation2] sm:$0xf] %vm413, %v495
        %v497 = vld [vmem:[#allocation2] sm:$0xf]
        %498 = vst.msk [vmem:[%s342] sm:$0xf] %vm416, %v497
        %v499 = vld [vmem:[#allocation2] sm:$0xf]
        %501 = vrot.lane.b32.xlu0 %v499, 120
        %v502 = vpop.permute.xlu0 %501
        %s504 = scalar_lea.vmem %s342, 4 [#allocation12]
        %505 = vst.msk [vmem:[%s504] sm:$0xf] %vm416, %v502
        %v506 = vld [vmem:[#allocation2] sm:$0xf]
        %508 = vrot.lane.b32.xlu0 %v506, 112
        %v509 = vpop.permute.xlu0 %508
        %s511 = scalar_lea.vmem %s342, 8 [#allocation12]
        %512 = vst.msk [vmem:[%s511] sm:$0xf] %vm416, %v509
        %v513 = vld [vmem:[#allocation2] sm:$0xf]
        %515 = vrot.lane.b32.xlu0 %v513, 104
        %v516 = vpop.permute.xlu0 %515
        %s518 = scalar_lea.vmem %s342, 12 [#allocation12]
        %519 = vst.msk [vmem:[%s518] sm:$0xf] %vm416, %v516
        %v520 = vld [vmem:[#allocation9] sm:$0xf]
        %v521 = vld [vmem:[#allocation9 + $0x4] sm:$0xf]
        %v522 = vld [vmem:[#allocation9 + $0x8] sm:$0xf]
        %v523 = vld [vmem:[#allocation9 + $0xc] sm:$0xf]
        %v528 = vunpack.c.l.b16 %v520
        %v529 = vunpack.c.l.b16 %v521
        %v530 = vunpack.c.l.b16 %v522
        %v531 = vunpack.c.l.b16 %v523
        %v532 = vpack.c.b16 %v529, %v528
        %v533 = vpack.c.b16 %v531, %v530
        %536 = vmatprep.subr.bf16.mxu0 0
        %537 = vmatpush1.bf16.msra.mxu0 0
        %538 = vmatprep.subr.bf16.mxu0 0
        %539 = vmatpush1.bf16.msra.mxu0 0
        %540 = vmatprep.subr.bf16.mxu0 0
        %541 = vmatpush1.bf16.msra.mxu0 0
        %542 = vmatprep.subr.bf16.mxu0 0
        %543 = vmatpush1.bf16.msra.mxu0 0
        %544 = vmatprep.subr.bf16.mxu0 0
        %545 = vmatpush1.bf16.msra.mxu0 0
        %546 = vmatprep.subr.bf16.mxu0 0
        %547 = vmatpush1.bf16.msra.mxu0 0
        %548 = vmatprep.subr.bf16.mxu0 0
        %549 = vmatpush1.bf16.msra.mxu0 %v533
        %550 = vmatprep.subr.bf16.mxu0 0
        %551 = vmatpush1.bf16.msra.mxu0 %v532
        %552 = vmatprep.subr.bf16.mxu0 0
        %553 = vmatpush2.bf16.msra.mxu0 0
        %554 = vmatprep.subr.bf16.mxu0 0
        %555 = vmatpush2.bf16.msra.mxu0 0
        %556 = vmatprep.subr.bf16.mxu0 0
        %557 = vmatpush2.bf16.msra.mxu0 0
        %558 = vmatprep.subr.bf16.mxu0 0
        %559 = vmatpush2.bf16.msra.mxu0 0
        %560 = vmatprep.subr.bf16.mxu0 0
        %561 = vmatpush2.bf16.msra.mxu0 0
        %562 = vmatprep.subr.bf16.mxu0 0
        %563 = vmatpush2.bf16.msra.mxu0 0
        %564 = vmatprep.subr.bf16.mxu0 0
        %565 = vmatpush2.bf16.msra.mxu0 0
        %566 = vmatprep.subr.bf16.mxu0 0
        %567 = vmatpush2.bf16.msra.mxu0 0
        %568 = vmatprep.mubr.bf16.mxu0 0
        %569 = vmatmul.mubr.bf16.gmra.mxu0 %v370
        %v570 = vpop.f32.mrf.mxu0
        %v571 = vadd.f32 0.0, %v570
        %v572 = vpop.f32.mrf.mxu0
        %v573 = vpop.f32.mrf.mxu0
        %v574 = vpop.f32.mrf.mxu0
        %575 = vdwg.mxu0
        %v576 = vpack.c.bf16 %v571, %v571
        %577 = vst.msk [vmem:[#allocation2] sm:$0xf] %vm413, %v576
        %v578 = vld [vmem:[#allocation2] sm:$0xf]
        %579 = vst.msk [vmem:[%s349] sm:$0xf] %vm416, %v578
        %v580 = vld [vmem:[#allocation2] sm:$0xf]
        %582 = vrot.lane.b32.xlu0 %v580, 120
        %v583 = vpop.permute.xlu0 %582
        %s585 = scalar_lea.vmem %s349, 4 [#allocation14]
        %586 = vst.msk [vmem:[%s585] sm:$0xf] %vm416, %v583
        %v587 = vld [vmem:[#allocation2] sm:$0xf]
        %589 = vrot.lane.b32.xlu0 %v587, 112
        %v590 = vpop.permute.xlu0 %589
        %s592 = scalar_lea.vmem %s349, 8 [#allocation14]
        %593 = vst.msk [vmem:[%s592] sm:$0xf] %vm416, %v590
        %v594 = vld [vmem:[#allocation2] sm:$0xf]
        %596 = vrot.lane.b32.xlu0 %v594, 104
        %v597 = vpop.permute.xlu0 %596
        %s599 = scalar_lea.vmem %s349, 12 [#allocation14]
        %600 = vst.msk [vmem:[%s599] sm:$0xf] %vm416, %v597
        %s601 = sand.u32 %s142, 1
        %s602 = scalar_lea.sflag [#allocation5], %s601
        %s603 = sand.u32 %s142, 1
        %s604 = smul.addr %s603, 16
        %s605 = scalar_lea.vmem [#allocation11], %s604
        %s606 = sand.u32 %s29, 1
        %s607 = scalar_lea.sflag [#allocation13], %s606
        %s608 = sand.u32 %s170, 1
        %s609 = smul.addr %s608, 16
        %s610 = scalar_lea.vmem [#allocation12], %s609
        %s611 = sand.u32 %s29, 1
        %s612 = scalar_lea.sflag [#allocation13], %s611
        %s613 = sand.u32 %s198, 1
        %s614 = smul.addr %s613, 16
        %s615 = scalar_lea.vmem [#allocation14], %s614
        // Predicated region
        $region53: #{tpu_custom_call.1} parent=35 // pred_check
          %p616 = pneg %p152
        $region54: #{tpu_custom_call.1} parent=35 // pred_check_branch
          %618 = sbr.rel (%p616) target = $region56
        $region55: #{tpu_custom_call.1} parent=35 // pred_region
          %s620 = ssub.s32 256, 256
          %621 = vsyncadd %s602, %s620
          %s622 = smul.addr %s33, 4
          %s623 = sadd.s32 %s34, %s622
          %s624 = smul.addr %s623, 64
          %s625 = scalar_lea.hbm %s4, %s624
          %s626 = sshll.u32 %s605, 4
          %s627 = int_to_ptr.vmem [resolvable:$true] %s626
          %632 = dma.vmem_to_hbm [thread:$0]  %s627, 256, %s625, %s602, 64, 64, 4
        $region56: #{tpu_custom_call.1} parent=35 // pred_fallthru
          _
        // Predicated region
        $region57: #{tpu_custom_call.1} parent=35 // pred_check
          %p633 = pneg %p180
        $region58: #{tpu_custom_call.1} parent=35 // pred_check_branch
          %635 = sbr.rel (%p633) target = $region60
        $region59: #{tpu_custom_call.1} parent=35 // pred_region
          %s637 = ssub.s32 256, 256
          %638 = vsyncadd %s607, %s637
          %s639 = smul.addr %s33, 4
          %s640 = sadd.s32 %s34, %s639
          %s641 = smul.addr %s640, 64
          %s642 = scalar_lea.hbm %s5, %s641
          %s643 = sshll.u32 %s610, 4
          %s644 = int_to_ptr.vmem [resolvable:$true] %s643
          %649 = dma.vmem_to_hbm [thread:$0]  %s644, 256, %s642, %s607, 64, 64, 4
        $region60: #{tpu_custom_call.1} parent=35 // pred_fallthru
          _
        // Predicated region
        $region61: #{tpu_custom_call.1} parent=35 // pred_check
          %p650 = pneg %p208
        $region62: #{tpu_custom_call.1} parent=35 // pred_check_branch
          %652 = sbr.rel (%p650) target = $region64
        $region63: #{tpu_custom_call.1} parent=35 // pred_region
          %s654 = ssub.s32 256, 256
          %655 = vsyncadd %s612, %s654
          %s656 = smul.addr %s33, 4
          %s657 = sadd.s32 %s34, %s656
          %s658 = smul.addr %s657, 64
          %s659 = scalar_lea.hbm %s6, %s658
          %s660 = sshll.u32 %s615, 4
          %s661 = int_to_ptr.vmem [resolvable:$true] %s660
          %666 = dma.vmem_to_hbm [thread:$0]  %s661, 256, %s659, %s612, 64, 64, 4
        $region64: #{tpu_custom_call.1} parent=35 // pred_fallthru
          _
      $region36: #{tpu_custom_call.1} parent=5 // pred_fallthru
        _
      %p667 = scmp.le.s32.totalorder 2, %s24
      // Predicated region
      $region65: #{tpu_custom_call.1} parent=5 // pred_check
        %p668 = pneg %p667
      $region66: #{tpu_custom_call.1} parent=5 // pred_check_branch
        %670 = sbr.rel (%p668) target = $region68
      $region67: #{tpu_custom_call.1} parent=5 // pred_region
        %s671 = ssub.s32 %s24, 2
        // Predicated region
        $region69: #{tpu_custom_call.1} parent=67 // pred_check
          %p672 = pneg %p158
        $region70: #{tpu_custom_call.1} parent=67 // pred_check_branch
          %674 = sbr.rel (%p672) target = $region72
        $region71: #{tpu_custom_call.1} parent=67 // pred_region
          %s675 = sand.u32 %s143, 1
          %s676 = scalar_lea.sflag [#allocation5], %s675
          %s677 = sand.u32 %s143, 1
          %s678 = smul.addr %s677, 16
          %s679 = scalar_lea.vmem [#allocation11], %s678
          %680 = dma.done %s676, 256
        $region72: #{tpu_custom_call.1} parent=67 // pred_fallthru
          _
        // Predicated region
        $region73: #{tpu_custom_call.1} parent=67 // pred_check
          %p681 = pneg %p186
        $region74: #{tpu_custom_call.1} parent=67 // pred_check_branch
          %683 = sbr.rel (%p681) target = $region76
        $region75: #{tpu_custom_call.1} parent=67 // pred_region
          %s684 = sand.u32 %s30, 1
          %s685 = scalar_lea.sflag [#allocation13], %s684
          %s686 = sand.u32 %s171, 1
          %s687 = smul.addr %s686, 16
          %s688 = scalar_lea.vmem [#allocation12], %s687
          %689 = dma.done %s685, 256
        $region76: #{tpu_custom_call.1} parent=67 // pred_fallthru
          _
        // Predicated region
        $region77: #{tpu_custom_call.1} parent=67 // pred_check
          %p690 = pneg %p214
        $region78: #{tpu_custom_call.1} parent=67 // pred_check_branch
          %692 = sbr.rel (%p690) target = $region80
        $region79: #{tpu_custom_call.1} parent=67 // pred_region
          %s693 = sand.u32 %s30, 1
          %s694 = scalar_lea.sflag [#allocation13], %s693
          %s695 = sand.u32 %s199, 1
          %s696 = smul.addr %s695, 16
          %s697 = scalar_lea.vmem [#allocation14], %s696
          %698 = dma.done %s694, 256
        $region80: #{tpu_custom_call.1} parent=67 // pred_fallthru
          _
      $region68: #{tpu_custom_call.1} parent=5 // pred_fallthru
        _
    $region6: #{tpu_custom_call.1} parent=1 // loop_footer
      %s28 = sadd.s32 1, %s24
    $region7: #{tpu_custom_call.1} parent=1 // loop_footer_branch
      %23 = sbr.rel target = $region3
    $region8: #{tpu_custom_call.1} parent=1 // loop_exit
      _
    %699 = vsyncpa [#allocation4], 1
    %s700 = scalar_lea.sflag [#allocation4], 1
    %701 = vsyncpa %s700, 1
    %702 = vsyncpa [#allocation7], 1
    %703 = vsyncpa [#allocation10], 1
    %704 = vsyncpa [#allocation5], 1
    %s705 = scalar_lea.sflag [#allocation5], 1
    %706 = vsyncpa %s705, 1
    %707 = vsyncpa [#allocation13], 1
    %s708 = scalar_lea.sflag [#allocation13], 1
    %709 = vsyncpa %s708, 1

</llo_original>
